<compile_context>
chip_gen: v6e
topology: v6e:2x2x1
jax: 0.10.0
libtpu: 0.0.40
codegen_flags: <defaults>
</compile_context>

<pallas_src>
import functools

import jax
import jax.numpy as jnp
import numpy as np
from jax.experimental import pallas as pl
from jax.experimental.pallas import tpu as pltpu


def attention_fusion_kernel(W, pre_ref, post_ref, w1_ref, b1_ref, w2_ref,
                            mask_ref, b2_ref, out_ref, col_ref):
    # pre_ref / post_ref / out_ref : (C, HW)  f32   (batch dim squeezed)
    # w1_ref  : (C, 9*2C) bf16  -- 3x3 conv taps in im2col order, BN scale folded
    # b1_ref  : (C, 1)  f32     -- conv bias + BN shift folded
    # w2_ref  : (C, 1)  f32     -- 1x1 conv weights
    # mask_ref: (9, HW) f32     -- 0/1 zero-padding validity mask per tap
    # b2_ref  : (1,)    f32     -- 1x1 conv bias (SMEM scalar)
    # col_ref : (9*2C, HW) f32 VMEM scratch -- im2col matrix
    C, HW = pre_ref.shape

    pre = pre_ref[...]
    post = post_ref[...]

    def write_tap(row0, x, t, s):
        # col[row0:row0+C, p] = x[:, p + s] * mask[t, p]; zero where p+s is
        # out of range (those positions are exactly the conv zero-padding).
        if s == 0:
            col_ref[row0:row0 + C, :] = x * mask_ref[t:t + 1, :]
        elif s > 0:
            L = HW - s
            col_ref[row0:row0 + C, 0:L] = x[:, s:HW] * mask_ref[t:t + 1, 0:L]
            col_ref[row0:row0 + C, L:HW] = jnp.zeros((C, s), jnp.float32)
        else:
            a = -s
            L = HW - a
            col_ref[row0:row0 + C, a:HW] = x[:, 0:L] * mask_ref[t:t + 1, a:HW]
            col_ref[row0:row0 + C, 0:a] = jnp.zeros((C, a), jnp.float32)

    # Build the im2col matrix: tap-major rows, [pre channels | post channels]
    # per tap (no jnp.concatenate of pre/post -- two separate slab stores).
    for t in range(9):
        ky, kx = divmod(t, 3)
        s = (ky - 1) * W + (kx - 1)          # flat H*W shift for this tap
        write_tap(2 * C * t, pre, t, s)
        write_tap(2 * C * t + C, post, t, s)

    # Fused 3x3 conv (+ folded BatchNorm scale) as a single lane-dense matmul:
    # (C, 9*2C) @ (9*2C, HW).  bf16 MXU inputs, f32 accumulation.
    acc = jnp.dot(w1_ref[...], col_ref[...].astype(jnp.bfloat16),
                  preferred_element_type=jnp.float32)            # (C, HW)

    h = jnp.maximum(acc + b1_ref[...], 0.0)                      # bias/BN + ReLU

    # 1x1 conv C -> 1 as VPU multiply + cross-sublane reduction, then sigmoid.
    logits = jnp.sum(h * w2_ref[...], axis=0, keepdims=True) + b2_ref[0]
    attn = jax.nn.sigmoid(logits)                                # (1, HW)

    out_ref[...] = pre + post * attn                             # lane-dense store


def attention_fusion(pre_nchw, post_nchw, params):
    """Wrapper: NCHW in/out; parameter folding & layout plumbing in plain JAX."""
    pre = pre_nchw.astype(jnp.float32)
    post = post_nchw.astype(jnp.float32)
    N, C, H, W = pre.shape

    if post.shape[2:] != (H, W):
        # glue: matches F.interpolate(mode='bilinear', align_corners=False)
        post = jax.image.resize(post, (post.shape[0], C, H, W), method="bilinear")

    HW = H * W
    pre_f = pre.reshape(N, C, HW)
    post_f = post.reshape(N, C, HW)

    # Fold eval-mode BatchNorm into the 3x3 conv weight / bias.
    eps = 1e-5
    bn_scale = params["gamma"] / jnp.sqrt(params["var"] + eps)          # (C,)
    bn_shift = params["beta"] - params["mean"] * bn_scale
    # HWIO (3,3,2C,C) -> im2col order (C, 9*2C): w[co, t*2C + ci], t = ky*3+kx
    w1 = jnp.transpose(params["w1"].reshape(9, 2 * C, C), (2, 0, 1)).reshape(C, 18 * C)
    w1 = (w1 * bn_scale[:, None]).astype(jnp.bfloat16)
    b1 = (params["b1"] * bn_scale + bn_shift).reshape(C, 1).astype(jnp.float32)
    w2 = params["w2"].reshape(C, 1).astype(jnp.float32)
    b2 = params["b2"].reshape(1).astype(jnp.float32)

    # Zero-padding validity masks for the 9 conv taps over the flattened H*W
    # grid (compile-time constants; avoids in-kernel div/mod row/col recovery).
    yy = np.arange(H)
    xx = np.arange(W)
    masks = np.zeros((9, H, W), np.float32)
    for t in range(9):
        ky, kx = divmod(t, 3)
        vy = (yy + ky - 1 >= 0) & (yy + ky - 1 < H)
        vx = (xx + kx - 1 >= 0) & (xx + kx - 1 < W)
        masks[t] = (vy[:, None] & vx[None, :]).astype(np.float32)
    masks = jnp.asarray(masks.reshape(9, HW))

    kernel = functools.partial(attention_fusion_kernel, W)

    out = pl.pallas_call(
        kernel,
        out_shape=jax.ShapeDtypeStruct((N, C, HW), jnp.float32),
        grid_spec=pltpu.PrefetchScalarGridSpec(
            num_scalar_prefetch=0,
            # grid=(N,) parallel: on v7x each TensorCore takes one batch
            # element.  At realistic H,W add a spatial (halo) tile axis and
            # set vmem_limit_bytes; whole-image blocks are fine at toy size.
            grid=(N,),
            in_specs=[
                pl.BlockSpec((None, C, HW), lambda n: (n, 0, 0)),   # pre
                pl.BlockSpec((None, C, HW), lambda n: (n, 0, 0)),   # post
                pl.BlockSpec((C, 18 * C), lambda n: (0, 0)),        # w1 folded, bf16
                pl.BlockSpec((C, 1), lambda n: (0, 0)),             # b1 folded
                pl.BlockSpec((C, 1), lambda n: (0, 0)),             # w2
                pl.BlockSpec((9, HW), lambda n: (0, 0)),            # pad masks
                pl.BlockSpec(memory_space=pltpu.MemorySpace.SMEM),  # b2 scalar
            ],
            out_specs=pl.BlockSpec((None, C, HW), lambda n: (n, 0, 0)),
            scratch_shapes=[pltpu.VMEM((18 * C, HW), jnp.float32)],
        ),
        compiler_params=pltpu.CompilerParams(dimension_semantics=("parallel",)),
    )(pre_f, post_f, w1, b1, w2, masks, b2)

    return out.reshape(N, C, H, W)


def reference_nchw(pre_nchw, post_nchw, params):
    """Pure-JAX reference (full f32, HIGHEST precision) for correctness checking."""
    pre = jnp.transpose(pre_nchw, (0, 2, 3, 1)).astype(jnp.float32)
    post = jnp.transpose(post_nchw, (0, 2, 3, 1)).astype(jnp.float32)
    eps = 1e-5
    h = jax.lax.conv_general_dilated(
        jnp.concatenate([pre, post], axis=-1), params["w1"],
        window_strides=(1, 1), padding="SAME",
        dimension_numbers=("NHWC", "HWIO", "NHWC"),
        precision=jax.lax.Precision.HIGHEST) + params["b1"]
    h = (h - params["mean"]) / jnp.sqrt(params["var"] + eps) * params["gamma"] \
        + params["beta"]
    h = jnp.maximum(h, 0.0)
    a = jnp.einsum("nhwc,c->nhw", h, params["w2"],
                   precision=jax.lax.Precision.HIGHEST) + params["b2"]
    a = jax.nn.sigmoid(a)[..., None]
    out = pre + post * a
    return jnp.transpose(out, (0, 3, 1, 2))


if __name__ == "__main__":
    N, C, H, W = 2, 4, 16, 16

    # Deterministic inputs (PyTorch NCHW convention).
    key0 = jax.random.PRNGKey(0)
    k_pre, k_post = jax.random.split(key0)
    pre_feat = jax.random.normal(k_pre, (N, C, H, W), jnp.float32)
    post_feat = jax.random.normal(k_post, (N, C, H, W), jnp.float32)

    # Deterministic synthetic parameters (shapes from the module's __init__).
    kp = jax.random.PRNGKey(42)
    k1, k2, k3, k4, k5, k6 = jax.random.split(kp, 6)
    params = {
        "w1": 0.1 * jax.random.normal(k1, (3, 3, 2 * C, C), jnp.float32),  # HWIO
        "b1": 0.1 * jax.random.normal(k2, (C,), jnp.float32),
        "gamma": 1.0 + 0.1 * jax.random.normal(k3, (C,), jnp.float32),
        "beta": 0.1 * jax.random.normal(k4, (C,), jnp.float32),
        "mean": jnp.zeros((C,), jnp.float32),   # BN running stats (eval mode)
        "var": jnp.ones((C,), jnp.float32),
        "w2": 0.1 * jax.random.normal(k5, (C,), jnp.float32),   # conv 1x1, C->1
        "b2": 0.1 * jax.random.normal(k6, (), jnp.float32),
    }

    out = attention_fusion(pre_feat, post_feat, params)
    out = jax.block_until_ready(out)

    ref = jax.block_until_ready(reference_nchw(pre_feat, post_feat, params))
    assert out.shape == (N, C, H, W)
    # Kernel uses bf16 MXU inputs (f32 accumulation) per perf guidance; the
    # f32-exact reference therefore needs a ~1e-3-scale tolerance.
    np.testing.assert_allclose(np.asarray(out), np.asarray(ref),
                               rtol=2e-3, atol=2e-3)
    print("KERNEL_OK")
</pallas_src>

<mosaic_0001>
module attributes {stable_mosaic.version = 11 : i64} {
  func.func @attention_fusion_kernel(%arg0: i32, %arg1: memref<1x4x256xf32, #tpu.memory_space<vmem>>, %arg2: memref<1x4x256xf32, #tpu.memory_space<vmem>>, %arg3: memref<4x72xbf16, #tpu.memory_space<vmem>>, %arg4: memref<4x1xf32, #tpu.memory_space<vmem>>, %arg5: memref<4x1xf32, #tpu.memory_space<vmem>>, %arg6: memref<9x256xf32, #tpu.memory_space<vmem>>, %arg7: memref<1xf32, #tpu.memory_space<smem>>, %arg8: memref<1x4x256xf32, #tpu.memory_space<vmem>>, %arg9: memref<72x256xf32, #tpu.memory_space<vmem>>) attributes {dimension_semantics = [#tpu.dimension_semantics<parallel>], iteration_bounds = array<i64: 2>, scalar_prefetch = 0 : i64, scratch_operands = 1 : i64, tpu.core_type = #tpu.core_type<tc>, window_params = [{transform_indices = @transform_0, window_bounds = array<i64: 1, 4, 256>}, {transform_indices = @transform_1, window_bounds = array<i64: 1, 4, 256>}, {pipeline_mode = #tpu.pipeline_mode<synchronous>, transform_indices = @transform_2, window_bounds = array<i64: 4, 72>}, {pipeline_mode = #tpu.pipeline_mode<synchronous>, transform_indices = @transform_3, window_bounds = array<i64: 4, 1>}, {pipeline_mode = #tpu.pipeline_mode<synchronous>, transform_indices = @transform_4, window_bounds = array<i64: 4, 1>}, {pipeline_mode = #tpu.pipeline_mode<synchronous>, transform_indices = @transform_5, window_bounds = array<i64: 9, 256>}, {transform_indices = @transform_6, window_bounds = array<i64: 1>}, {transform_indices = @transform_7, window_bounds = array<i64: 1, 4, 256>}]} {
    %c0 = arith.constant 0 : index
    %c0_0 = arith.constant 0 : index
    %c0_1 = arith.constant 0 : index
    %0 = vector.load %arg1[%c0, %c0_0, %c0_1] : memref<1x4x256xf32, #tpu.memory_space<vmem>>, vector<1x4x256xf32>
    %1 = vector.shape_cast %0 : vector<1x4x256xf32> to vector<4x256xf32>
    %c0_2 = arith.constant 0 : index
    %c0_3 = arith.constant 0 : index
    %c0_4 = arith.constant 0 : index
    %2 = vector.load %arg2[%c0_2, %c0_3, %c0_4] : memref<1x4x256xf32, #tpu.memory_space<vmem>>, vector<1x4x256xf32>
    %3 = vector.shape_cast %2 : vector<1x4x256xf32> to vector<4x256xf32>
    %4 = vector.extract_strided_slice %1 {offsets = [0, 0], sizes = [4, 239], strides = [1, 1]} : vector<4x256xf32> to vector<4x239xf32>
    %c0_5 = arith.constant 0 : index
    %c17 = arith.constant 17 : index
    %5 = vector.load %arg6[%c0_5, %c17] : memref<9x256xf32, #tpu.memory_space<vmem>>, vector<1x239xf32>
    %6 = vector.broadcast %5 : vector<1x239xf32> to vector<4x239xf32>
    %7 = arith.mulf %4, %6 : vector<4x239xf32>
    %c0_6 = arith.constant 0 : index
    %c17_7 = arith.constant 17 : index
    %8 = vector.load %arg9[%c0_6, %c17_7] : memref<72x256xf32, #tpu.memory_space<vmem>>, vector<4x239xf32>
    tpu.vector_store %arg9[%c0_6, %c17_7], %7 {strides = array<i32>} : memref<72x256xf32, #tpu.memory_space<vmem>>, vector<4x239xf32>,
    %cst = arith.constant 0.000000e+00 : f32
    %9 = vector.broadcast %cst : f32 to vector<4x17xf32>
    %c0_8 = arith.constant 0 : index
    %c0_9 = arith.constant 0 : index
    %10 = vector.load %arg9[%c0_8, %c0_9] : memref<72x256xf32, #tpu.memory_space<vmem>>, vector<4x17xf32>
    tpu.vector_store %arg9[%c0_8, %c0_9], %9 {strides = array<i32>} : memref<72x256xf32, #tpu.memory_space<vmem>>, vector<4x17xf32>,
    %11 = vector.extract_strided_slice %3 {offsets = [0, 0], sizes = [4, 239], strides = [1, 1]} : vector<4x256xf32> to vector<4x239xf32>
    %c0_10 = arith.constant 0 : index
    %c17_11 = arith.constant 17 : index
    %12 = vector.load %arg6[%c0_10, %c17_11] : memref<9x256xf32, #tpu.memory_space<vmem>>, vector<1x239xf32>
    %13 = vector.broadcast %12 : vector<1x239xf32> to vector<4x239xf32>
    %14 = arith.mulf %11, %13 : vector<4x239xf32>
    %c4 = arith.constant 4 : index
    %c17_12 = arith.constant 17 : index
    %15 = vector.load %arg9[%c4, %c17_12] : memref<72x256xf32, #tpu.memory_space<vmem>>, vector<4x239xf32>
    tpu.vector_store %arg9[%c4, %c17_12], %14 {strides = array<i32>} : memref<72x256xf32, #tpu.memory_space<vmem>>, vector<4x239xf32>,
    %cst_13 = arith.constant 0.000000e+00 : f32
    %16 = vector.broadcast %cst_13 : f32 to vector<4x17xf32>
    %c4_14 = arith.constant 4 : index
    %c0_15 = arith.constant 0 : index
    %17 = vector.load %arg9[%c4_14, %c0_15] : memref<72x256xf32, #tpu.memory_space<vmem>>, vector<4x17xf32>
    tpu.vector_store %arg9[%c4_14, %c0_15], %16 {strides = array<i32>} : memref<72x256xf32, #tpu.memory_space<vmem>>, vector<4x17xf32>,
    %18 = vector.extract_strided_slice %1 {offsets = [0, 0], sizes = [4, 240], strides = [1, 1]} : vector<4x256xf32> to vector<4x240xf32>
    %c1 = arith.constant 1 : index
    %c16 = arith.constant 16 : index
    %19 = vector.load %arg6[%c1, %c16] : memref<9x256xf32, #tpu.memory_space<vmem>>, vector<1x240xf32>
    %20 = vector.broadcast %19 : vector<1x240xf32> to vector<4x240xf32>
    %21 = arith.mulf %18, %20 : vector<4x240xf32>
    %c8 = arith.constant 8 : index
    %c16_16 = arith.constant 16 : index
    %22 = vector.load %arg9[%c8, %c16_16] : memref<72x256xf32, #tpu.memory_space<vmem>>, vector<4x240xf32>
    tpu.vector_store %arg9[%c8, %c16_16], %21 {strides = array<i32>} : memref<72x256xf32, #tpu.memory_space<vmem>>, vector<4x240xf32>,
    %cst_17 = arith.constant 0.000000e+00 : f32
    %23 = vector.broadcast %cst_17 : f32 to vector<4x16xf32>
    %c8_18 = arith.constant 8 : index
    %c0_19 = arith.constant 0 : index
    %24 = vector.load %arg9[%c8_18, %c0_19] : memref<72x256xf32, #tpu.memory_space<vmem>>, vector<4x16xf32>
    tpu.vector_store %arg9[%c8_18, %c0_19], %23 {strides = array<i32>} : memref<72x256xf32, #tpu.memory_space<vmem>>, vector<4x16xf32>,
    %25 = vector.extract_strided_slice %3 {offsets = [0, 0], sizes = [4, 240], strides = [1, 1]} : vector<4x256xf32> to vector<4x240xf32>
    %c1_20 = arith.constant 1 : index
    %c16_21 = arith.constant 16 : index
    %26 = vector.load %arg6[%c1_20, %c16_21] : memref<9x256xf32, #tpu.memory_space<vmem>>, vector<1x240xf32>
    %27 = vector.broadcast %26 : vector<1x240xf32> to vector<4x240xf32>
    %28 = arith.mulf %25, %27 : vector<4x240xf32>
    %c12 = arith.constant 12 : index
    %c16_22 = arith.constant 16 : index
    %29 = vector.load %arg9[%c12, %c16_22] : memref<72x256xf32, #tpu.memory_space<vmem>>, vector<4x240xf32>
    tpu.vector_store %arg9[%c12, %c16_22], %28 {strides = array<i32>} : memref<72x256xf32, #tpu.memory_space<vmem>>, vector<4x240xf32>,
    %cst_23 = arith.constant 0.000000e+00 : f32
    %30 = vector.broadcast %cst_23 : f32 to vector<4x16xf32>
    %c12_24 = arith.constant 12 : index
    %c0_25 = arith.constant 0 : index
    %31 = vector.load %arg9[%c12_24, %c0_25] : memref<72x256xf32, #tpu.memory_space<vmem>>, vector<4x16xf32>
    tpu.vector_store %arg9[%c12_24, %c0_25], %30 {strides = array<i32>} : memref<72x256xf32, #tpu.memory_space<vmem>>, vector<4x16xf32>,
    %32 = vector.extract_strided_slice %1 {offsets = [0, 0], sizes = [4, 241], strides = [1, 1]} : vector<4x256xf32> to vector<4x241xf32>
    %c2 = arith.constant 2 : index
    %c15 = arith.constant 15 : index
    %33 = vector.load %arg6[%c2, %c15] : memref<9x256xf32, #tpu.memory_space<vmem>>, vector<1x241xf32>
    %34 = vector.broadcast %33 : vector<1x241xf32> to vector<4x241xf32>
    %35 = arith.mulf %32, %34 : vector<4x241xf32>
    %c16_26 = arith.constant 16 : index
    %c15_27 = arith.constant 15 : index
    %36 = vector.load %arg9[%c16_26, %c15_27] : memref<72x256xf32, #tpu.memory_space<vmem>>, vector<4x241xf32>
    tpu.vector_store %arg9[%c16_26, %c15_27], %35 {strides = array<i32>} : memref<72x256xf32, #tpu.memory_space<vmem>>, vector<4x241xf32>,
    %cst_28 = arith.constant 0.000000e+00 : f32
    %37 = vector.broadcast %cst_28 : f32 to vector<4x15xf32>
    %c16_29 = arith.constant 16 : index
    %c0_30 = arith.constant 0 : index
    %38 = vector.load %arg9[%c16_29, %c0_30] : memref<72x256xf32, #tpu.memory_space<vmem>>, vector<4x15xf32>
    tpu.vector_store %arg9[%c16_29, %c0_30], %37 {strides = array<i32>} : memref<72x256xf32, #tpu.memory_space<vmem>>, vector<4x15xf32>,
    %39 = vector.extract_strided_slice %3 {offsets = [0, 0], sizes = [4, 241], strides = [1, 1]} : vector<4x256xf32> to vector<4x241xf32>
    %c2_31 = arith.constant 2 : index
    %c15_32 = arith.constant 15 : index
    %40 = vector.load %arg6[%c2_31, %c15_32] : memref<9x256xf32, #tpu.memory_space<vmem>>, vector<1x241xf32>
    %41 = vector.broadcast %40 : vector<1x241xf32> to vector<4x241xf32>
    %42 = arith.mulf %39, %41 : vector<4x241xf32>
    %c20 = arith.constant 20 : index
    %c15_33 = arith.constant 15 : index
    %43 = vector.load %arg9[%c20, %c15_33] : memref<72x256xf32, #tpu.memory_space<vmem>>, vector<4x241xf32>
    tpu.vector_store %arg9[%c20, %c15_33], %42 {strides = array<i32>} : memref<72x256xf32, #tpu.memory_space<vmem>>, vector<4x241xf32>,
    %cst_34 = arith.constant 0.000000e+00 : f32
    %44 = vector.broadcast %cst_34 : f32 to vector<4x15xf32>
    %c20_35 = arith.constant 20 : index
    %c0_36 = arith.constant 0 : index
    %45 = vector.load %arg9[%c20_35, %c0_36] : memref<72x256xf32, #tpu.memory_space<vmem>>, vector<4x15xf32>
    tpu.vector_store %arg9[%c20_35, %c0_36], %44 {strides = array<i32>} : memref<72x256xf32, #tpu.memory_space<vmem>>, vector<4x15xf32>,
    %46 = vector.extract_strided_slice %1 {offsets = [0, 0], sizes = [4, 255], strides = [1, 1]} : vector<4x256xf32> to vector<4x255xf32>
    %c3 = arith.constant 3 : index
    %c1_37 = arith.constant 1 : index
    %47 = vector.load %arg6[%c3, %c1_37] : memref<9x256xf32, #tpu.memory_space<vmem>>, vector<1x255xf32>
    %48 = vector.broadcast %47 : vector<1x255xf32> to vector<4x255xf32>
    %49 = arith.mulf %46, %48 : vector<4x255xf32>
    %c24 = arith.constant 24 : index
    %c1_38 = arith.constant 1 : index
    %50 = vector.load %arg9[%c24, %c1_38] : memref<72x256xf32, #tpu.memory_space<vmem>>, vector<4x255xf32>
    tpu.vector_store %arg9[%c24, %c1_38], %49 {strides = array<i32>} : memref<72x256xf32, #tpu.memory_space<vmem>>, vector<4x255xf32>,
    %cst_39 = arith.constant 0.000000e+00 : f32
    %51 = vector.broadcast %cst_39 : f32 to vector<4x1xf32>
    %c24_40 = arith.constant 24 : index
    %c0_41 = arith.constant 0 : index
    %52 = vector.load %arg9[%c24_40, %c0_41] : memref<72x256xf32, #tpu.memory_space<vmem>>, vector<4x1xf32>
    tpu.vector_store %arg9[%c24_40, %c0_41], %51 {strides = array<i32>} : memref<72x256xf32, #tpu.memory_space<vmem>>, vector<4x1xf32>,
    %53 = vector.extract_strided_slice %3 {offsets = [0, 0], sizes = [4, 255], strides = [1, 1]} : vector<4x256xf32> to vector<4x255xf32>
    %c3_42 = arith.constant 3 : index
    %c1_43 = arith.constant 1 : index
    %54 = vector.load %arg6[%c3_42, %c1_43] : memref<9x256xf32, #tpu.memory_space<vmem>>, vector<1x255xf32>
    %55 = vector.broadcast %54 : vector<1x255xf32> to vector<4x255xf32>
    %56 = arith.mulf %53, %55 : vector<4x255xf32>
    %c28 = arith.constant 28 : index
    %c1_44 = arith.constant 1 : index
    %57 = vector.load %arg9[%c28, %c1_44] : memref<72x256xf32, #tpu.memory_space<vmem>>, vector<4x255xf32>
    tpu.vector_store %arg9[%c28, %c1_44], %56 {strides = array<i32>} : memref<72x256xf32, #tpu.memory_space<vmem>>, vector<4x255xf32>,
    %cst_45 = arith.constant 0.000000e+00 : f32
    %58 = vector.broadcast %cst_45 : f32 to vector<4x1xf32>
    %c28_46 = arith.constant 28 : index
    %c0_47 = arith.constant 0 : index
    %59 = vector.load %arg9[%c28_46, %c0_47] : memref<72x256xf32, #tpu.memory_space<vmem>>, vector<4x1xf32>
    tpu.vector_store %arg9[%c28_46, %c0_47], %58 {strides = array<i32>} : memref<72x256xf32, #tpu.memory_space<vmem>>, vector<4x1xf32>,
    %c4_48 = arith.constant 4 : index
    %c0_49 = arith.constant 0 : index
    %60 = vector.load %arg6[%c4_48, %c0_49] : memref<9x256xf32, #tpu.memory_space<vmem>>, vector<1x256xf32>
    %61 = vector.broadcast %60 : vector<1x256xf32> to vector<4x256xf32>
    %62 = arith.mulf %1, %61 : vector<4x256xf32>
    %c32 = arith.constant 32 : index
    %c0_50 = arith.constant 0 : index
    %63 = vector.load %arg9[%c32, %c0_50] : memref<72x256xf32, #tpu.memory_space<vmem>>, vector<4x256xf32>
    tpu.vector_store %arg9[%c32, %c0_50], %62 {strides = array<i32>} : memref<72x256xf32, #tpu.memory_space<vmem>>, vector<4x256xf32>,
    %c4_51 = arith.constant 4 : index
    %c0_52 = arith.constant 0 : index
    %64 = vector.load %arg6[%c4_51, %c0_52] : memref<9x256xf32, #tpu.memory_space<vmem>>, vector<1x256xf32>
    %65 = vector.broadcast %64 : vector<1x256xf32> to vector<4x256xf32>
    %66 = arith.mulf %3, %65 : vector<4x256xf32>
    %c36 = arith.constant 36 : index
    %c0_53 = arith.constant 0 : index
    %67 = vector.load %arg9[%c36, %c0_53] : memref<72x256xf32, #tpu.memory_space<vmem>>, vector<4x256xf32>
    tpu.vector_store %arg9[%c36, %c0_53], %66 {strides = array<i32>} : memref<72x256xf32, #tpu.memory_space<vmem>>, vector<4x256xf32>,
    %68 = vector.extract_strided_slice %1 {offsets = [0, 1], sizes = [4, 255], strides = [1, 1]} : vector<4x256xf32> to vector<4x255xf32>
    %c5 = arith.constant 5 : index
    %c0_54 = arith.constant 0 : index
    %69 = vector.load %arg6[%c5, %c0_54] : memref<9x256xf32, #tpu.memory_space<vmem>>, vector<1x255xf32>
    %70 = vector.broadcast %69 : vector<1x255xf32> to vector<4x255xf32>
    %71 = arith.mulf %68, %70 : vector<4x255xf32>
    %c40 = arith.constant 40 : index
    %c0_55 = arith.constant 0 : index
    %72 = vector.load %arg9[%c40, %c0_55] : memref<72x256xf32, #tpu.memory_space<vmem>>, vector<4x255xf32>
    tpu.vector_store %arg9[%c40, %c0_55], %71 {strides = array<i32>} : memref<72x256xf32, #tpu.memory_space<vmem>>, vector<4x255xf32>,
    %cst_56 = arith.constant 0.000000e+00 : f32
    %73 = vector.broadcast %cst_56 : f32 to vector<4x1xf32>
    %c40_57 = arith.constant 40 : index
    %c255 = arith.constant 255 : index
    %74 = vector.load %arg9[%c40_57, %c255] : memref<72x256xf32, #tpu.memory_space<vmem>>, vector<4x1xf32>
    tpu.vector_store %arg9[%c40_57, %c255], %73 {strides = array<i32>} : memref<72x256xf32, #tpu.memory_space<vmem>>, vector<4x1xf32>,
    %75 = vector.extract_strided_slice %3 {offsets = [0, 1], sizes = [4, 255], strides = [1, 1]} : vector<4x256xf32> to vector<4x255xf32>
    %c5_58 = arith.constant 5 : index
    %c0_59 = arith.constant 0 : index
    %76 = vector.load %arg6[%c5_58, %c0_59] : memref<9x256xf32, #tpu.memory_space<vmem>>, vector<1x255xf32>
    %77 = vector.broadcast %76 : vector<1x255xf32> to vector<4x255xf32>
    %78 = arith.mulf %75, %77 : vector<4x255xf32>
    %c44 = arith.constant 44 : index
    %c0_60 = arith.constant 0 : index
    %79 = vector.load %arg9[%c44, %c0_60] : memref<72x256xf32, #tpu.memory_space<vmem>>, vector<4x255xf32>
    tpu.vector_store %arg9[%c44, %c0_60], %78 {strides = array<i32>} : memref<72x256xf32, #tpu.memory_space<vmem>>, vector<4x255xf32>,
    %cst_61 = arith.constant 0.000000e+00 : f32
    %80 = vector.broadcast %cst_61 : f32 to vector<4x1xf32>
    %c44_62 = arith.constant 44 : index
    %c255_63 = arith.constant 255 : index
    %81 = vector.load %arg9[%c44_62, %c255_63] : memref<72x256xf32, #tpu.memory_space<vmem>>, vector<4x1xf32>
    tpu.vector_store %arg9[%c44_62, %c255_63], %80 {strides = array<i32>} : memref<72x256xf32, #tpu.memory_space<vmem>>, vector<4x1xf32>,
    %82 = vector.extract_strided_slice %1 {offsets = [0, 15], sizes = [4, 241], strides = [1, 1]} : vector<4x256xf32> to vector<4x241xf32>
    %c6 = arith.constant 6 : index
    %c0_64 = arith.constant 0 : index
    %83 = vector.load %arg6[%c6, %c0_64] : memref<9x256xf32, #tpu.memory_space<vmem>>, vector<1x241xf32>
    %84 = vector.broadcast %83 : vector<1x241xf32> to vector<4x241xf32>
    %85 = arith.mulf %82, %84 : vector<4x241xf32>
    %c48 = arith.constant 48 : index
    %c0_65 = arith.constant 0 : index
    %86 = vector.load %arg9[%c48, %c0_65] : memref<72x256xf32, #tpu.memory_space<vmem>>, vector<4x241xf32>
    tpu.vector_store %arg9[%c48, %c0_65], %85 {strides = array<i32>} : memref<72x256xf32, #tpu.memory_space<vmem>>, vector<4x241xf32>,
    %cst_66 = arith.constant 0.000000e+00 : f32
    %87 = vector.broadcast %cst_66 : f32 to vector<4x15xf32>
    %c48_67 = arith.constant 48 : index
    %c241 = arith.constant 241 : index
    %88 = vector.load %arg9[%c48_67, %c241] : memref<72x256xf32, #tpu.memory_space<vmem>>, vector<4x15xf32>
    tpu.vector_store %arg9[%c48_67, %c241], %87 {strides = array<i32>} : memref<72x256xf32, #tpu.memory_space<vmem>>, vector<4x15xf32>,
    %89 = vector.extract_strided_slice %3 {offsets = [0, 15], sizes = [4, 241], strides = [1, 1]} : vector<4x256xf32> to vector<4x241xf32>
    %c6_68 = arith.constant 6 : index
    %c0_69 = arith.constant 0 : index
    %90 = vector.load %arg6[%c6_68, %c0_69] : memref<9x256xf32, #tpu.memory_space<vmem>>, vector<1x241xf32>
    %91 = vector.broadcast %90 : vector<1x241xf32> to vector<4x241xf32>
    %92 = arith.mulf %89, %91 : vector<4x241xf32>
    %c52 = arith.constant 52 : index
    %c0_70 = arith.constant 0 : index
    %93 = vector.load %arg9[%c52, %c0_70] : memref<72x256xf32, #tpu.memory_space<vmem>>, vector<4x241xf32>
    tpu.vector_store %arg9[%c52, %c0_70], %92 {strides = array<i32>} : memref<72x256xf32, #tpu.memory_space<vmem>>, vector<4x241xf32>,
    %cst_71 = arith.constant 0.000000e+00 : f32
    %94 = vector.broadcast %cst_71 : f32 to vector<4x15xf32>
    %c52_72 = arith.constant 52 : index
    %c241_73 = arith.constant 241 : index
    %95 = vector.load %arg9[%c52_72, %c241_73] : memref<72x256xf32, #tpu.memory_space<vmem>>, vector<4x15xf32>
    tpu.vector_store %arg9[%c52_72, %c241_73], %94 {strides = array<i32>} : memref<72x256xf32, #tpu.memory_space<vmem>>, vector<4x15xf32>,
    %96 = vector.extract_strided_slice %1 {offsets = [0, 16], sizes = [4, 240], strides = [1, 1]} : vector<4x256xf32> to vector<4x240xf32>
    %c7 = arith.constant 7 : index
    %c0_74 = arith.constant 0 : index
    %97 = vector.load %arg6[%c7, %c0_74] : memref<9x256xf32, #tpu.memory_space<vmem>>, vector<1x240xf32>
    %98 = vector.broadcast %97 : vector<1x240xf32> to vector<4x240xf32>
    %99 = arith.mulf %96, %98 : vector<4x240xf32>
    %c56 = arith.constant 56 : index
    %c0_75 = arith.constant 0 : index
    %100 = vector.load %arg9[%c56, %c0_75] : memref<72x256xf32, #tpu.memory_space<vmem>>, vector<4x240xf32>
    tpu.vector_store %arg9[%c56, %c0_75], %99 {strides = array<i32>} : memref<72x256xf32, #tpu.memory_space<vmem>>, vector<4x240xf32>,
    %cst_76 = arith.constant 0.000000e+00 : f32
    %101 = vector.broadcast %cst_76 : f32 to vector<4x16xf32>
    %c56_77 = arith.constant 56 : index
    %c240 = arith.constant 240 : index
    %102 = vector.load %arg9[%c56_77, %c240] : memref<72x256xf32, #tpu.memory_space<vmem>>, vector<4x16xf32>
    tpu.vector_store %arg9[%c56_77, %c240], %101 {strides = array<i32>} : memref<72x256xf32, #tpu.memory_space<vmem>>, vector<4x16xf32>,
    %103 = vector.extract_strided_slice %3 {offsets = [0, 16], sizes = [4, 240], strides = [1, 1]} : vector<4x256xf32> to vector<4x240xf32>
    %c7_78 = arith.constant 7 : index
    %c0_79 = arith.constant 0 : index
    %104 = vector.load %arg6[%c7_78, %c0_79] : memref<9x256xf32, #tpu.memory_space<vmem>>, vector<1x240xf32>
    %105 = vector.broadcast %104 : vector<1x240xf32> to vector<4x240xf32>
    %106 = arith.mulf %103, %105 : vector<4x240xf32>
    %c60 = arith.constant 60 : index
    %c0_80 = arith.constant 0 : index
    %107 = vector.load %arg9[%c60, %c0_80] : memref<72x256xf32, #tpu.memory_space<vmem>>, vector<4x240xf32>
    tpu.vector_store %arg9[%c60, %c0_80], %106 {strides = array<i32>} : memref<72x256xf32, #tpu.memory_space<vmem>>, vector<4x240xf32>,
    %cst_81 = arith.constant 0.000000e+00 : f32
    %108 = vector.broadcast %cst_81 : f32 to vector<4x16xf32>
    %c60_82 = arith.constant 60 : index
    %c240_83 = arith.constant 240 : index
    %109 = vector.load %arg9[%c60_82, %c240_83] : memref<72x256xf32, #tpu.memory_space<vmem>>, vector<4x16xf32>
    tpu.vector_store %arg9[%c60_82, %c240_83], %108 {strides = array<i32>} : memref<72x256xf32, #tpu.memory_space<vmem>>, vector<4x16xf32>,
    %110 = vector.extract_strided_slice %1 {offsets = [0, 17], sizes = [4, 239], strides = [1, 1]} : vector<4x256xf32> to vector<4x239xf32>
    %c8_84 = arith.constant 8 : index
    %c0_85 = arith.constant 0 : index
    %111 = vector.load %arg6[%c8_84, %c0_85] : memref<9x256xf32, #tpu.memory_space<vmem>>, vector<1x239xf32>
    %112 = vector.broadcast %111 : vector<1x239xf32> to vector<4x239xf32>
    %113 = arith.mulf %110, %112 : vector<4x239xf32>
    %c64 = arith.constant 64 : index
    %c0_86 = arith.constant 0 : index
    %114 = vector.load %arg9[%c64, %c0_86] : memref<72x256xf32, #tpu.memory_space<vmem>>, vector<4x239xf32>
    tpu.vector_store %arg9[%c64, %c0_86], %113 {strides = array<i32>} : memref<72x256xf32, #tpu.memory_space<vmem>>, vector<4x239xf32>,
    %cst_87 = arith.constant 0.000000e+00 : f32
    %115 = vector.broadcast %cst_87 : f32 to vector<4x17xf32>
    %c64_88 = arith.constant 64 : index
    %c239 = arith.constant 239 : index
    %116 = vector.load %arg9[%c64_88, %c239] : memref<72x256xf32, #tpu.memory_space<vmem>>, vector<4x17xf32>
    tpu.vector_store %arg9[%c64_88, %c239], %115 {strides = array<i32>} : memref<72x256xf32, #tpu.memory_space<vmem>>, vector<4x17xf32>,
    %117 = vector.extract_strided_slice %3 {offsets = [0, 17], sizes = [4, 239], strides = [1, 1]} : vector<4x256xf32> to vector<4x239xf32>
    %c8_89 = arith.constant 8 : index
    %c0_90 = arith.constant 0 : index
    %118 = vector.load %arg6[%c8_89, %c0_90] : memref<9x256xf32, #tpu.memory_space<vmem>>, vector<1x239xf32>
    %119 = vector.broadcast %118 : vector<1x239xf32> to vector<4x239xf32>
    %120 = arith.mulf %117, %119 : vector<4x239xf32>
    %c68 = arith.constant 68 : index
    %c0_91 = arith.constant 0 : index
    %121 = vector.load %arg9[%c68, %c0_91] : memref<72x256xf32, #tpu.memory_space<vmem>>, vector<4x239xf32>
    tpu.vector_store %arg9[%c68, %c0_91], %120 {strides = array<i32>} : memref<72x256xf32, #tpu.memory_space<vmem>>, vector<4x239xf32>,
    %cst_92 = arith.constant 0.000000e+00 : f32
    %122 = vector.broadcast %cst_92 : f32 to vector<4x17xf32>
    %c68_93 = arith.constant 68 : index
    %c239_94 = arith.constant 239 : index
    %123 = vector.load %arg9[%c68_93, %c239_94] : memref<72x256xf32, #tpu.memory_space<vmem>>, vector<4x17xf32>
    tpu.vector_store %arg9[%c68_93, %c239_94], %122 {strides = array<i32>} : memref<72x256xf32, #tpu.memory_space<vmem>>, vector<4x17xf32>,
    %c0_95 = arith.constant 0 : index
    %c0_96 = arith.constant 0 : index
    %124 = vector.load %arg3[%c0_95, %c0_96] : memref<4x72xbf16, #tpu.memory_space<vmem>>, vector<4x72xbf16>
    %c0_97 = arith.constant 0 : index
    %c0_98 = arith.constant 0 : index
    %125 = vector.load %arg9[%c0_97, %c0_98] : memref<72x256xf32, #tpu.memory_space<vmem>>, vector<72x256xf32>
    %126 = arith.truncf %125 : vector<72x256xf32> to vector<72x256xbf16>
    %cst_99 = arith.constant dense<0.000000e+00> : vector<4x256xf32>
    %127 = tpu.matmul %124, %126, %cst_99 {dimension_numbers = #tpu.dot_dimension_numbers<[1], [0], [0], [1], [0, 0, 1, 1], [], []>} : vector<4x72xbf16>, vector<72x256xbf16>, vector<4x256xf32> -> vector<4x256xf32>
    %c0_100 = arith.constant 0 : index
    %c0_101 = arith.constant 0 : index
    %128 = vector.load %arg4[%c0_100, %c0_101] : memref<4x1xf32, #tpu.memory_space<vmem>>, vector<4x1xf32>
    %129 = vector.broadcast %128 : vector<4x1xf32> to vector<4x256xf32>
    %130 = arith.addf %127, %129 : vector<4x256xf32>
    %cst_102 = arith.constant 0.000000e+00 : f32
    %131 = vector.broadcast %cst_102 : f32 to vector<4x256xf32>
    %132 = arith.maximumf %130, %131 : vector<4x256xf32>
    %c0_103 = arith.constant 0 : index
    %c0_104 = arith.constant 0 : index
    %133 = vector.load %arg5[%c0_103, %c0_104] : memref<4x1xf32, #tpu.memory_space<vmem>>, vector<4x1xf32>
    %134 = vector.broadcast %133 : vector<4x1xf32> to vector<4x256xf32>
    %135 = arith.mulf %132, %134 : vector<4x256xf32>
    %cst_105 = arith.constant dense<0.000000e+00> : vector<256xf32>
    %136 = vector.multi_reduction <add>, %135, %cst_105 [0] : vector<4x256xf32> to vector<256xf32>
    %137 = vector.shape_cast %136 : vector<256xf32> to vector<1x256xf32>
    %c0_106 = arith.constant 0 : index
    %138 = memref.load %arg7[%c0_106] : memref<1xf32, #tpu.memory_space<smem>>
    %139 = vector.broadcast %138 : f32 to vector<1x256xf32>
    %140 = arith.addf %137, %139 : vector<1x256xf32>
    %141 = arith.negf %140 : vector<1x256xf32>
    %142 = math.exp %141 : vector<1x256xf32>
    %cst_107 = arith.constant 1.000000e+00 : f32
    %143 = vector.broadcast %cst_107 : f32 to vector<1x256xf32>
    %144 = arith.addf %143, %142 : vector<1x256xf32>
    %145 = arith.divf %143, %144 : vector<1x256xf32>
    %146 = vector.broadcast %145 : vector<1x256xf32> to vector<4x256xf32>
    %147 = arith.mulf %3, %146 : vector<4x256xf32>
    %148 = arith.addf %1, %147 : vector<4x256xf32>
    %c0_108 = arith.constant 0 : index
    %c0_109 = arith.constant 0 : index
    %c0_110 = arith.constant 0 : index
    %149 = vector.load %arg8[%c0_108, %c0_109, %c0_110] : memref<1x4x256xf32, #tpu.memory_space<vmem>>, vector<1x4x256xf32>
    %150 = vector.shape_cast %149 : vector<1x4x256xf32> to vector<4x256xf32>
    %151 = vector.shape_cast %148 : vector<4x256xf32> to vector<1x4x256xf32>
    tpu.vector_store %arg8[%c0_108, %c0_109, %c0_110], %151 {strides = array<i32>} : memref<1x4x256xf32, #tpu.memory_space<vmem>>, vector<1x4x256xf32>,
    return
  }
  func.func @transform_0(%arg0: i32) -> (i32, i32, i32) {
    %c0_i32 = arith.constant 0 : i32
    %c0_i32_0 = arith.constant 0 : i32
    %c0_i32_1 = arith.constant 0 : i32
    return %arg0, %c0_i32, %c0_i32_0 : i32, i32, i32
  }
  func.func @transform_1(%arg0: i32) -> (i32, i32, i32) {
    %c0_i32 = arith.constant 0 : i32
    %c0_i32_0 = arith.constant 0 : i32
    %c0_i32_1 = arith.constant 0 : i32
    return %arg0, %c0_i32, %c0_i32_0 : i32, i32, i32
  }
  func.func @transform_2(%arg0: i32) -> (i32, i32) {
    %c0_i32 = arith.constant 0 : i32
    %c0_i32_0 = arith.constant 0 : i32
    %c0_i32_1 = arith.constant 0 : i32
    return %c0_i32, %c0_i32_0 : i32, i32
  }
  func.func @transform_3(%arg0: i32) -> (i32, i32) {
    %c0_i32 = arith.constant 0 : i32
    %c0_i32_0 = arith.constant 0 : i32
    %c0_i32_1 = arith.constant 0 : i32
    return %c0_i32, %c0_i32_0 : i32, i32
  }
  func.func @transform_4(%arg0: i32) -> (i32, i32) {
    %c0_i32 = arith.constant 0 : i32
    %c0_i32_0 = arith.constant 0 : i32
    %c0_i32_1 = arith.constant 0 : i32
    return %c0_i32, %c0_i32_0 : i32, i32
  }
  func.func @transform_5(%arg0: i32) -> (i32, i32) {
    %c0_i32 = arith.constant 0 : i32
    %c0_i32_0 = arith.constant 0 : i32
    %c0_i32_1 = arith.constant 0 : i32
    return %c0_i32, %c0_i32_0 : i32, i32
  }
  func.func @transform_6(%arg0: i32) -> i32 {
    %c0_i32 = arith.constant 0 : i32
    %c0_i32_0 = arith.constant 0 : i32
    return %c0_i32 : i32
  }
  func.func @transform_7(%arg0: i32) -> (i32, i32, i32) {
    %c0_i32 = arith.constant 0 : i32
    %c0_i32_0 = arith.constant 0 : i32
    %c0_i32_1 = arith.constant 0 : i32
    return %arg0, %c0_i32, %c0_i32_0 : i32, i32, i32
  }
}

</mosaic_0001>

<llo_original>
// kernel: tpu_custom_call.1
$region0: #{tpu_custom_call.1}
  #allocation0 [shape = 'u32[]', space=smem, size = 0x4, offset = 0x4, fixed_abs, tag = 'smem constant byte address 0x4 - core index']
  #allocation1 [shape = 'u32[144,128]{1,0:T(1,128)}', space=vmem, size = 0x12000, scoped, tag = 'internal scratch']
  #allocation2 [shape = 'f32[72,256]{1,0:T(8,128)}', space=vmem, size = 0x12000, scoped, tag = 'scratch operand']
  #allocation3 [shape = 'f32[1]{0:T(128)S(6)}', space=smem, size = 0x200, scoped, tag = 'scoped memory for tpu_custom_call.1']
  %s0 = inlined_call_operand.hbm [shape: f32[2,4,256], index: 0, kind: input, shape index: {}]
  %s1 = inlined_call_operand.hbm [shape: f32[2,4,256], index: 1, kind: input, shape index: {}]
  %s2 = inlined_call_operand.vmem [shape: bf16[4,72], index: 2, kind: input, shape index: {}]
  %s3 = inlined_call_operand.vmem [shape: f32[4,1], index: 3, kind: input, shape index: {}]
  %s4 = inlined_call_operand.vmem [shape: f32[4,1], index: 4, kind: input, shape index: {}]
  %s5 = inlined_call_operand.hbm [shape: f32[9,256], index: 5, kind: input, shape index: {}]
  %s6 = inlined_call_operand.<no memory space> [shape: f32[1], index: 6, kind: input, shape index: {}]
  %s7 = inlined_call_operand.hbm [shape: f32[2,4,256], index: 7, kind: output, shape index: {}]
  %s8 = sld [smem:[#allocation0]]
  $region73: #{tpu_custom_call.1} parent=0
    _
  %s10 = ssub.s32 1, %s8
  %s11 = scalar_select 0, %s10, %s8
  %12 = sst [smem:[#allocation3]] %s6
  $region1: #{tpu_custom_call.1} parent=0
    #allocation4 [shape = 'u8[8192]{0}', space=vmem, size = 0x2000, scoped, tag = 'input window, operand 0']
    #allocation5 [shape = 's32[2]{0}', space=sflag, size = 0x8, scoped, tag = 'scoped memory for tpu_custom_call.1']
    #allocation6 [shape = 's32[2]{0}', space=sflag, size = 0x8, scoped, tag = 'scoped memory for tpu_custom_call.1']
    #allocation7 [shape = 'u8[8192]{0}', space=vmem, size = 0x2000, scoped, tag = 'input window, operand 1']
    #allocation8 [shape = 's32[2]{0}', space=sflag, size = 0x8, scoped, tag = 'scoped memory for tpu_custom_call.1']
    #allocation9 [shape = 'u8[16384]{0}', space=vmem, size = 0x4000, scoped, tag = 'input window, operand 5, single buffered']
    #allocation10 [shape = 'u8[8192]{0}', space=vmem, size = 0x2000, scoped, tag = 'output window, operand 0']
    %13 = vsyncpa [#allocation5], 0
    %s14 = scalar_lea.sflag [#allocation5], 1
    %15 = vsyncpa %s14, 0
    %16 = vsyncpa [#allocation8], 0
    %s17 = scalar_lea.sflag [#allocation8], 1
    %18 = vsyncpa %s17, 0
    %19 = vsyncpa [#allocation6], 0
    %s20 = scalar_lea.sflag [#allocation6], 1
    %21 = vsyncpa %s20, 0
    loop: start=0, step=1, limit=4
    $region2: #{tpu_custom_call.1} parent=1 // loop_pre_header
      _
    $region3: #{tpu_custom_call.1} parent=1 // loop_header
      %s23 = sphi 0, %s27
      %p24 = scmp.ge.s32.totalorder %s23, 4
      %s33 = sphi 0, %s35
      %s36 = sphi 0, %s33
      %s37 = sphi 0, %s36
      %s53 = sphi 0, %s37
      %s59 = sphi 0, %s61
      %s62 = sphi 0, %s59
      %s63 = sphi 0, %s62
      %s79 = sphi 0, %s63
      %s83 = sphi 0, %s83
      %s85 = sphi 0, %s83
      %s86 = sphi 0, %s85
      %s100 = sphi 0, %s86
      %s104 = sphi 0, %s104
      %s106 = sphi 0, %s104
      %s107 = sphi 0, %s106
      %s121 = sphi 0, %s107
      %s125 = sphi 0, %s125
      %s127 = sphi 0, %s125
      %s128 = sphi 0, %s127
      %s142 = sphi 0, %s128
      %s146 = sphi 0, %s146
      %s148 = sphi 0, %s146
      %s149 = sphi 0, %s148
      %s163 = sphi 0, %s149
      %s167 = sphi 0, %s167
      %s169 = sphi 0, %s167
      %s170 = sphi 0, %s169
      %s184 = sphi 0, %s170
      %s190 = sphi 0, %s192
      %s193 = sphi 0, %s190
      %s194 = sphi 0, %s193
      %s210 = sphi 0, %s194
    $region4: #{tpu_custom_call.1} parent=1 // loop_header_branch
      %26 = sbr.rel (%p24) target = $region8
    $region5: #{tpu_custom_call.1} parent=1 // loop_body
      %s28 = ssub.s32 %s23, 1
      %s29 = ssub.s32 %s23, 2
      %s30 = sadd.s32 %s23, 1
      %s31 = ssub.s32 %s23, %s30
      %p32 = scmp.eq.s32.totalorder %s31, 0
      %s34 = sadd.s32 %s33, 1
      %s35 = scalar_select %p32, %s33, %s34
      %p38 = pneg %p32
      %p39 = scmp.eq.s32.totalorder %s23, 1
      %p40 = por %p38, %p39
      %p41 = scmp.ne.s32.totalorder %s33, %s36
      %p42 = scmp.eq.s32.totalorder %s23, 0
      %p43 = por %p41, %p42
      %p44 = scmp.ne.s32.totalorder %s33, %s36
      %p45 = scmp.eq.s32.totalorder %s28, 1
      %p46 = por %p44, %p45
      %p47 = scmp.ne.s32.totalorder %s36, %s37
      %p48 = scmp.eq.s32.totalorder %s28, 0
      %p49 = por %p47, %p48
      %p50 = scmp.ne.s32.totalorder %s36, %s37
      %p51 = scmp.eq.s32.totalorder %s29, 1
      %p52 = por %p50, %p51
      %p54 = scmp.ne.s32.totalorder %s37, %s53
      %p55 = scmp.eq.s32.totalorder %s29, 0
      %p56 = por %p54, %p55
      %s57 = ssub.s32 %s23, %s30
      %p58 = scmp.eq.s32.totalorder %s57, 0
      %s60 = sadd.s32 %s59, 1
      %s61 = scalar_select %p58, %s59, %s60
      %p64 = pneg %p58
      %p65 = scmp.eq.s32.totalorder %s23, 1
      %p66 = por %p64, %p65
      %p67 = scmp.ne.s32.totalorder %s59, %s62
      %p68 = scmp.eq.s32.totalorder %s23, 0
      %p69 = por %p67, %p68
      %p70 = scmp.ne.s32.totalorder %s59, %s62
      %p71 = scmp.eq.s32.totalorder %s28, 1
      %p72 = por %p70, %p71
      %p73 = scmp.ne.s32.totalorder %s62, %s63
      %p74 = scmp.eq.s32.totalorder %s28, 0
      %p75 = por %p73, %p74
      %p76 = scmp.ne.s32.totalorder %s62, %s63
      %p77 = scmp.eq.s32.totalorder %s29, 1
      %p78 = por %p76, %p77
      %p80 = scmp.ne.s32.totalorder %s63, %s79
      %p81 = scmp.eq.s32.totalorder %s29, 0
      %p82 = por %p80, %p81
      %s84 = sadd.s32 %s83, 1
      %p87 = scmp.eq.s32.totalorder %s23, 1
      %p88 = scmp.ne.s32.totalorder %s83, %s85
      %p89 = scmp.eq.s32.totalorder %s23, 0
      %p90 = por %p88, %p89
      %p91 = scmp.ne.s32.totalorder %s83, %s85
      %p92 = scmp.eq.s32.totalorder %s28, 1
      %p93 = por %p91, %p92
      %p94 = scmp.ne.s32.totalorder %s85, %s86
      %p95 = scmp.eq.s32.totalorder %s28, 0
      %p96 = por %p94, %p95
      %p97 = scmp.ne.s32.totalorder %s85, %s86
      %p98 = scmp.eq.s32.totalorder %s29, 1
      %p99 = por %p97, %p98
      %p101 = scmp.ne.s32.totalorder %s86, %s100
      %p102 = scmp.eq.s32.totalorder %s29, 0
      %p103 = por %p101, %p102
      %s105 = sadd.s32 %s104, 1
      %p108 = scmp.eq.s32.totalorder %s23, 1
      %p109 = scmp.ne.s32.totalorder %s104, %s106
      %p110 = scmp.eq.s32.totalorder %s23, 0
      %p111 = por %p109, %p110
      %p112 = scmp.ne.s32.totalorder %s104, %s106
      %p113 = scmp.eq.s32.totalorder %s28, 1
      %p114 = por %p112, %p113
      %p115 = scmp.ne.s32.totalorder %s106, %s107
      %p116 = scmp.eq.s32.totalorder %s28, 0
      %p117 = por %p115, %p116
      %p118 = scmp.ne.s32.totalorder %s106, %s107
      %p119 = scmp.eq.s32.totalorder %s29, 1
      %p120 = por %p118, %p119
      %p122 = scmp.ne.s32.totalorder %s107, %s121
      %p123 = scmp.eq.s32.totalorder %s29, 0
      %p124 = por %p122, %p123
      %s126 = sadd.s32 %s125, 1
      %p129 = scmp.eq.s32.totalorder %s23, 1
      %p130 = scmp.ne.s32.totalorder %s125, %s127
      %p131 = scmp.eq.s32.totalorder %s23, 0
      %p132 = por %p130, %p131
      %p133 = scmp.ne.s32.totalorder %s125, %s127
      %p134 = scmp.eq.s32.totalorder %s28, 1
      %p135 = por %p133, %p134
      %p136 = scmp.ne.s32.totalorder %s127, %s128
      %p137 = scmp.eq.s32.totalorder %s28, 0
      %p138 = por %p136, %p137
      %p139 = scmp.ne.s32.totalorder %s127, %s128
      %p140 = scmp.eq.s32.totalorder %s29, 1
      %p141 = por %p139, %p140
      %p143 = scmp.ne.s32.totalorder %s128, %s142
      %p144 = scmp.eq.s32.totalorder %s29, 0
      %p145 = por %p143, %p144
      %s147 = sadd.s32 %s146, 1
      %p150 = scmp.eq.s32.totalorder %s23, 1
      %p151 = scmp.ne.s32.totalorder %s146, %s148
      %p152 = scmp.eq.s32.totalorder %s23, 0
      %p153 = por %p151, %p152
      %p154 = scmp.ne.s32.totalorder %s146, %s148
      %p155 = scmp.eq.s32.totalorder %s28, 1
      %p156 = por %p154, %p155
      %p157 = scmp.ne.s32.totalorder %s148, %s149
      %p158 = scmp.eq.s32.totalorder %s28, 0
      %p159 = por %p157, %p158
      %p160 = scmp.ne.s32.totalorder %s148, %s149
      %p161 = scmp.eq.s32.totalorder %s29, 1
      %p162 = por %p160, %p161
      %p164 = scmp.ne.s32.totalorder %s149, %s163
      %p165 = scmp.eq.s32.totalorder %s29, 0
      %p166 = por %p164, %p165
      %s168 = sadd.s32 %s167, 1
      %p171 = scmp.eq.s32.totalorder %s23, 1
      %p172 = scmp.ne.s32.totalorder %s167, %s169
      %p173 = scmp.eq.s32.totalorder %s23, 0
      %p174 = por %p172, %p173
      %p175 = scmp.ne.s32.totalorder %s167, %s169
      %p176 = scmp.eq.s32.totalorder %s28, 1
      %p177 = por %p175, %p176
      %p178 = scmp.ne.s32.totalorder %s169, %s170
      %p179 = scmp.eq.s32.totalorder %s28, 0
      %p180 = por %p178, %p179
      %p181 = scmp.ne.s32.totalorder %s169, %s170
      %p182 = scmp.eq.s32.totalorder %s29, 1
      %p183 = por %p181, %p182
      %p185 = scmp.ne.s32.totalorder %s170, %s184
      %p186 = scmp.eq.s32.totalorder %s29, 0
      %p187 = por %p185, %p186
      %s188 = ssub.s32 %s23, %s30
      %p189 = scmp.eq.s32.totalorder %s188, 0
      %s191 = sadd.s32 %s190, 1
      %s192 = scalar_select %p189, %s190, %s191
      %p195 = pneg %p189
      %p196 = scmp.eq.s32.totalorder %s23, 1
      %p197 = por %p195, %p196
      %p198 = scmp.ne.s32.totalorder %s190, %s193
      %p199 = scmp.eq.s32.totalorder %s23, 0
      %p200 = por %p198, %p199
      %p201 = scmp.ne.s32.totalorder %s190, %s193
      %p202 = scmp.eq.s32.totalorder %s28, 1
      %p203 = por %p201, %p202
      %p204 = scmp.ne.s32.totalorder %s193, %s194
      %p205 = scmp.eq.s32.totalorder %s28, 0
      %p206 = por %p204, %p205
      %p207 = scmp.ne.s32.totalorder %s193, %s194
      %p208 = scmp.eq.s32.totalorder %s29, 1
      %p209 = por %p207, %p208
      %p211 = scmp.ne.s32.totalorder %s194, %s210
      %p212 = scmp.eq.s32.totalorder %s29, 0
      %p213 = por %p211, %p212
      %p214 = scmp.le.s32.totalorder 1, %s23
      %p215 = scmp.lt.s32.totalorder %s23, 3
      %p216 = pnand %p214, %p215
      %p217 = pneg %p216
      // Predicated region
      $region9: #{tpu_custom_call.1} parent=5 // pred_check
        _
      $region10: #{tpu_custom_call.1} parent=5 // pred_check_branch
        %219 = sbr.rel (%p216) target = $region12
      $region11: #{tpu_custom_call.1} parent=5 // pred_region
        %s220 = ssub.s32 %s23, 1
        // Predicated region
        $region13: #{tpu_custom_call.1} parent=11 // pred_check
          %p221 = pneg %p96
        $region14: #{tpu_custom_call.1} parent=11 // pred_check_branch
          %223 = sbr.rel (%p221) target = $region16
        $region15: #{tpu_custom_call.1} parent=11 // pred_region
          _
        $region16: #{tpu_custom_call.1} parent=11 // pred_fallthru
          _
        // Predicated region
        $region17: #{tpu_custom_call.1} parent=11 // pred_check
          %p224 = pneg %p117
        $region18: #{tpu_custom_call.1} parent=11 // pred_check_branch
          %226 = sbr.rel (%p224) target = $region20
        $region19: #{tpu_custom_call.1} parent=11 // pred_region
          _
        $region20: #{tpu_custom_call.1} parent=11 // pred_fallthru
          _
        // Predicated region
        $region21: #{tpu_custom_call.1} parent=11 // pred_check
          %p227 = pneg %p138
        $region22: #{tpu_custom_call.1} parent=11 // pred_check_branch
          %229 = sbr.rel (%p227) target = $region24
        $region23: #{tpu_custom_call.1} parent=11 // pred_region
          _
        $region24: #{tpu_custom_call.1} parent=11 // pred_fallthru
          _
        // Predicated region
        $region25: #{tpu_custom_call.1} parent=11 // pred_check
          %p230 = pneg %p159
        $region26: #{tpu_custom_call.1} parent=11 // pred_check_branch
          %232 = sbr.rel (%p230) target = $region28
        $region27: #{tpu_custom_call.1} parent=11 // pred_region
          %s234 = ssub.s32 512, 512
          %235 = vsyncadd [#allocation8], %s234
          %s236 = sshll.u32 [#allocation9], 4
          %s237 = int_to_ptr.vmem [resolvable:$true] %s236
          %242 = dma.hbm_to_vmem [thread:$0]  %s5, 512, %s237, [#allocation8], 256, 256, 16
        $region28: #{tpu_custom_call.1} parent=11 // pred_fallthru
          _
        // Predicated region
        $region29: #{tpu_custom_call.1} parent=11 // pred_check
          %p243 = pneg %p180
        $region30: #{tpu_custom_call.1} parent=11 // pred_check_branch
          %245 = sbr.rel (%p243) target = $region32
        $region31: #{tpu_custom_call.1} parent=11 // pred_region
          _
        $region32: #{tpu_custom_call.1} parent=11 // pred_fallthru
          _
      $region12: #{tpu_custom_call.1} parent=5 // pred_fallthru
        _
      %p246 = scmp.lt.s32.totalorder %s23, 2
      // Predicated region
      $region33: #{tpu_custom_call.1} parent=5 // pred_check
        %p247 = pneg %p246
      $region34: #{tpu_custom_call.1} parent=5 // pred_check_branch
        %249 = sbr.rel (%p247) target = $region36
      $region35: #{tpu_custom_call.1} parent=5 // pred_region
        // Predicated region
        $region37: #{tpu_custom_call.1} parent=35 // pred_check
          %p250 = pneg %p43
        $region38: #{tpu_custom_call.1} parent=35 // pred_check_branch
          %252 = sbr.rel (%p250) target = $region40
        $region39: #{tpu_custom_call.1} parent=35 // pred_region
          %s253 = sand.u32 %s33, 1
          %s254 = scalar_lea.sflag [#allocation5], %s253
          %s255 = sand.u32 %s33, 1
          %s256 = smul.addr %s255, 8
          %s257 = scalar_lea.vmem [#allocation4], %s256
          %s259 = ssub.s32 128, 128
          %260 = vsyncadd %s254, %s259
          %s261 = smul.addr %s23, 2
          %s262 = smul.addr %s261, 64
          %s263 = scalar_lea.hbm %s0, %s262
          %s265 = sshll.u32 %s257, 4
          %s266 = int_to_ptr.vmem [resolvable:$true] %s265
          %268 = dma.hbm_to_vmem [thread:$0]  %s263, 128, %s266, %s254
        $region40: #{tpu_custom_call.1} parent=35 // pred_fallthru
          _
        // Predicated region
        $region41: #{tpu_custom_call.1} parent=35 // pred_check
          %p269 = pneg %p69
        $region42: #{tpu_custom_call.1} parent=35 // pred_check_branch
          %271 = sbr.rel (%p269) target = $region44
        $region43: #{tpu_custom_call.1} parent=35 // pred_region
          %s272 = sand.u32 %s23, 1
          %s273 = scalar_lea.sflag [#allocation8], %s272
          %s274 = sand.u32 %s59, 1
          %s275 = smul.addr %s274, 8
          %s276 = scalar_lea.vmem [#allocation7], %s275
          %s278 = ssub.s32 128, 128
          %279 = vsyncadd %s273, %s278
          %s280 = smul.addr %s23, 2
          %s281 = smul.addr %s280, 64
          %s282 = scalar_lea.hbm %s1, %s281
          %s284 = sshll.u32 %s276, 4
          %s285 = int_to_ptr.vmem [resolvable:$true] %s284
          %287 = dma.hbm_to_vmem [thread:$0]  %s282, 128, %s285, %s273
        $region44: #{tpu_custom_call.1} parent=35 // pred_fallthru
          _
      $region36: #{tpu_custom_call.1} parent=5 // pred_fallthru
        _
      %p288 = scmp.le.s32.totalorder 1, %s23
      %p289 = scmp.lt.s32.totalorder %s23, 3
      %p290 = pnand %p288, %p289
      %p291 = pneg %p290
      // Predicated region
      $region45: #{tpu_custom_call.1} parent=5 // pred_check
        _
      $region46: #{tpu_custom_call.1} parent=5 // pred_check_branch
        %293 = sbr.rel (%p290) target = $region48
      $region47: #{tpu_custom_call.1} parent=5 // pred_region
        %s294 = ssub.s32 %s23, 1
        %s295 = sand.u32 %s36, 1
        %s296 = scalar_lea.sflag [#allocation5], %s295
        %s297 = sand.u32 %s36, 1
        %s298 = smul.addr %s297, 8
        %s299 = scalar_lea.vmem [#allocation4], %s298
        // Predicated region
        $region49: #{tpu_custom_call.1} parent=47 // pred_check
          %p300 = pneg %p49
        $region50: #{tpu_custom_call.1} parent=47 // pred_check_branch
          %302 = sbr.rel (%p300) target = $region52
        $region51: #{tpu_custom_call.1} parent=47 // pred_region
          %303 = dma.done %s296, 128
        $region52: #{tpu_custom_call.1} parent=47 // pred_fallthru
          _
        %s304 = sand.u32 %s28, 1
        %s305 = scalar_lea.sflag [#allocation8], %s304
        %s306 = sand.u32 %s62, 1
        %s307 = smul.addr %s306, 8
        %s308 = scalar_lea.vmem [#allocation7], %s307
        // Predicated region
        $region53: #{tpu_custom_call.1} parent=47 // pred_check
          %p309 = pneg %p75
        $region54: #{tpu_custom_call.1} parent=47 // pred_check_branch
          %311 = sbr.rel (%p309) target = $region56
        $region55: #{tpu_custom_call.1} parent=47 // pred_region
          %312 = dma.done %s305, 128
        $region56: #{tpu_custom_call.1} parent=47 // pred_fallthru
          _
        // Predicated region
        $region57: #{tpu_custom_call.1} parent=47 // pred_check
          %p313 = pneg %p159
        $region58: #{tpu_custom_call.1} parent=47 // pred_check_branch
          %315 = sbr.rel (%p313) target = $region60
        $region59: #{tpu_custom_call.1} parent=47 // pred_region
          %316 = dma.done [#allocation8], 512
        $region60: #{tpu_custom_call.1} parent=47 // pred_fallthru
          _
        %s317 = sand.u32 %s36, 1
        %s318 = scalar_lea.sflag [#allocation5], %s317
        %s319 = sand.u32 %s36, 1
        %s320 = smul.addr %s319, 8
        %s321 = scalar_lea.vmem [#allocation4], %s320
        %p322 = pneg %p49
        %p323 = pneg %p46
        %s324 = sand.u32 %s28, 1
        %s325 = scalar_lea.sflag [#allocation8], %s324
        %s326 = sand.u32 %s62, 1
        %s327 = smul.addr %s326, 8
        %s328 = scalar_lea.vmem [#allocation7], %s327
        %p329 = pneg %p75
        %p330 = pneg %p72
        %p331 = pneg %p96
        %p332 = pneg %p93
        %p333 = pneg %p117
        %p334 = pneg %p114
        %p335 = pneg %p138
        %p336 = pneg %p135
        %p337 = pneg %p159
        %p338 = pneg %p156
        %p339 = pneg %p180
        %p340 = pneg %p177
        %p341 = pneg %p206
        %p342 = pneg %p203
        %s343 = sand.u32 %s193, 1
        %s344 = scalar_lea.sflag [#allocation6], %s343
        %s345 = sand.u32 %s193, 1
        %s346 = smul.addr %s345, 8
        %s347 = scalar_lea.vmem [#allocation10], %s346
        %v349 = vld [vmem:[%s299] sm:$0xff]
        %v350 = vld [vmem:[%s308] sm:$0xff]
        %v351 = vld [vmem:[#allocation9] ss:$8 sm:$0x3]
        %v353 = vlaneseq
        %v354 = vshrl.u32 %v353, 7
        %v355 = vsub.s32 0, %v354
        %v356 = vrot.slane %v351, %v355
        %v357 = vlaneseq
        %v358 = vshrl.u32 %v357, 7
        %v359 = vsub.s32 1, %v358
        %v360 = vrot.slane %v351, %v359
        %v361 = vcombine.low %v356, %v360
        %362 = vrot.lane.b32.xlu0 %v361, 111
        %v363 = vpop.permute.xlu0 %362
        %v364 = vrot.slane %v363, 4
        %vm365 = vcmask 908288
        %v366 = vsel %vm365, %v363, %v364
        %v368 = vmul.f32 %v349, %v366
        %v370 = vcombine.high %v368, %v368
        %371 = vrot.lane.b32.xlu0 %v368, 17
        %v372 = vpop.permute.xlu0 %371
        %373 = vrot.lane.b32.xlu0 %v370, 17
        %v374 = vpop.permute.xlu0 %373
        %vm375 = vcmask 138240
        %v376 = vsel %vm375, %v372, %v374
        %vm379 = vcmask 1043592
        %380 = vst.msk [vmem:[#allocation2] sm:$0xf] %vm379, %v372
        %381 = vst [vmem:[#allocation2 + $0x8] sm:$0xf] %v376
        %vm382 = vcmask 134144
        %383 = vst.msk [vmem:[#allocation2] sm:$0xf] %vm382, 0.0
        %v384 = vld [vmem:[#allocation9] ss:$8 sm:$0x3]
        %v386 = vlaneseq
        %v387 = vshrl.u32 %v386, 7
        %v388 = vsub.s32 0, %v387
        %v389 = vrot.slane %v384, %v388
        %v390 = vlaneseq
        %v391 = vshrl.u32 %v390, 7
        %v392 = vsub.s32 1, %v391
        %v393 = vrot.slane %v384, %v392
        %v394 = vcombine.low %v389, %v393
        %395 = vrot.lane.b32.xlu0 %v394, 111
        %v396 = vpop.permute.xlu0 %395
        %v397 = vrot.slane %v396, 4
        %v398 = vsel %vm365, %v396, %v397
        %v400 = vmul.f32 %v350, %v398
        %v402 = vcombine.low %v400, %v400
        %403 = vrot.lane.b32.xlu0 %v402, 17
        %v404 = vpop.permute.xlu0 %403
        %405 = vrot.lane.b32.xlu0 %v400, 17
        %v406 = vpop.permute.xlu0 %405
        %v407 = vsel %vm375, %v404, %v406
        %vm410 = vcmask 1047692
        %411 = vst.msk [vmem:[#allocation2] sm:$0xf0] %vm410, %v404
        %412 = vst [vmem:[#allocation2 + $0x8] sm:$0xf0] %v407
        %vm413 = vcmask 138244
        %414 = vst.msk [vmem:[#allocation2] sm:$0xf0] %vm413, 0.0
        %s415 = scalar_lea.vmem [#allocation9], 1
        %v416 = vld [vmem:[%s415] ss:$8 sm:$0x3]
        %v418 = vlaneseq
        %v419 = vshrl.u32 %v418, 7
        %v420 = vsub.s32 0, %v419
        %v421 = vrot.slane %v416, %v420
        %v422 = vlaneseq
        %v423 = vshrl.u32 %v422, 7
        %v424 = vsub.s32 1, %v423
        %v425 = vrot.slane %v416, %v424
        %v426 = vcombine.low %v421, %v425
        %427 = vrot.lane.b32.xlu0 %v426, 112
        %v428 = vpop.permute.xlu0 %427
        %v429 = vrot.slane %v428, 4
        %vm430 = vcmask 916480
        %v431 = vsel %vm430, %v428, %v429
        %v433 = vmul.f32 %v349, %v431
        %v435 = vcombine.high %v433, %v433
        %436 = vrot.lane.b32.xlu0 %v433, 16
        %v437 = vpop.permute.xlu0 %436
        %438 = vrot.lane.b32.xlu0 %v435, 16
        %v439 = vpop.permute.xlu0 %438
        %vm440 = vcmask 130048
        %v441 = vsel %vm440, %v437, %v439
        %vm444 = vcmask 1043584
        %445 = vst.msk [vmem:[#allocation2 + $0x10] sm:$0xf] %vm444, %v437
        %446 = vst [vmem:[#allocation2 + $0x18] sm:$0xf] %v441
        %vm447 = vcmask 125952
        %448 = vst.msk [vmem:[#allocation2 + $0x10] sm:$0xf] %vm447, 0.0
        %v449 = vld [vmem:[%s415] ss:$8 sm:$0x3]
        %v451 = vlaneseq
        %v452 = vshrl.u32 %v451, 7
        %v453 = vsub.s32 0, %v452
        %v454 = vrot.slane %v449, %v453
        %v455 = vlaneseq
        %v456 = vshrl.u32 %v455, 7
        %v457 = vsub.s32 1, %v456
        %v458 = vrot.slane %v449, %v457
        %v459 = vcombine.low %v454, %v458
        %460 = vrot.lane.b32.xlu0 %v459, 112
        %v461 = vpop.permute.xlu0 %460
        %v462 = vrot.slane %v461, 4
        %v463 = vsel %vm430, %v461, %v462
        %v465 = vmul.f32 %v350, %v463
        %v467 = vcombine.low %v465, %v465
        %468 = vrot.lane.b32.xlu0 %v467, 16
        %v469 = vpop.permute.xlu0 %468
        %470 = vrot.lane.b32.xlu0 %v465, 16
        %v471 = vpop.permute.xlu0 %470
        %v472 = vsel %vm440, %v469, %v471
        %vm475 = vcmask 1047684
        %476 = vst.msk [vmem:[#allocation2 + $0x10] sm:$0xf0] %vm475, %v469
        %477 = vst [vmem:[#allocation2 + $0x18] sm:$0xf0] %v472
        %vm478 = vcmask 130052
        %479 = vst.msk [vmem:[#allocation2 + $0x10] sm:$0xf0] %vm478, 0.0
        %s480 = scalar_lea.vmem [#allocation9], 2
        %v481 = vld [vmem:[%s480] ss:$8 sm:$0x3]
        %v483 = vlaneseq
        %v484 = vshrl.u32 %v483, 7
        %v485 = vsub.s32 0, %v484
        %v486 = vrot.slane %v481, %v485
        %v487 = vlaneseq
        %v488 = vshrl.u32 %v487, 7
        %v489 = vsub.s32 1, %v488
        %v490 = vrot.slane %v481, %v489
        %v491 = vcombine.low %v486, %v490
        %492 = vrot.lane.b32.xlu0 %v491, 113
        %v493 = vpop.permute.xlu0 %492
        %v494 = vrot.slane %v493, 4
        %vm495 = vcmask 924672
        %v496 = vsel %vm495, %v493, %v494
        %v498 = vmul.f32 %v349, %v496
        %v500 = vcombine.high %v498, %v498
        %501 = vrot.lane.b32.xlu0 %v498, 15
        %v502 = vpop.permute.xlu0 %501
        %503 = vrot.lane.b32.xlu0 %v500, 15
        %v504 = vpop.permute.xlu0 %503
        %vm505 = vcmask 121856
        %v506 = vsel %vm505, %v502, %v504
        %vm509 = vcmask 1043576
        %510 = vst.msk [vmem:[#allocation2 + $0x20] sm:$0xf] %vm509, %v502
        %511 = vst [vmem:[#allocation2 + $0x28] sm:$0xf] %v506
        %vm512 = vcmask 117760
        %513 = vst.msk [vmem:[#allocation2 + $0x20] sm:$0xf] %vm512, 0.0
        %v514 = vld [vmem:[%s480] ss:$8 sm:$0x3]
        %v516 = vlaneseq
        %v517 = vshrl.u32 %v516, 7
        %v518 = vsub.s32 0, %v517
        %v519 = vrot.slane %v514, %v518
        %v520 = vlaneseq
        %v521 = vshrl.u32 %v520, 7
        %v522 = vsub.s32 1, %v521
        %v523 = vrot.slane %v514, %v522
        %v524 = vcombine.low %v519, %v523
        %525 = vrot.lane.b32.xlu0 %v524, 113
        %v526 = vpop.permute.xlu0 %525
        %v527 = vrot.slane %v526, 4
        %v528 = vsel %vm495, %v526, %v527
        %v530 = vmul.f32 %v350, %v528
        %v532 = vcombine.low %v530, %v530
        %533 = vrot.lane.b32.xlu0 %v532, 15
        %v534 = vpop.permute.xlu0 %533
        %535 = vrot.lane.b32.xlu0 %v530, 15
        %v536 = vpop.permute.xlu0 %535
        %v537 = vsel %vm505, %v534, %v536
        %vm540 = vcmask 1047676
        %541 = vst.msk [vmem:[#allocation2 + $0x20] sm:$0xf0] %vm540, %v534
        %542 = vst [vmem:[#allocation2 + $0x28] sm:$0xf0] %v537
        %vm543 = vcmask 121860
        %544 = vst.msk [vmem:[#allocation2 + $0x20] sm:$0xf0] %vm543, 0.0
        %s545 = scalar_lea.vmem [#allocation9], 3
        %v546 = vld [vmem:[%s545] ss:$8 sm:$0x3]
        %v548 = vlaneseq
        %v549 = vshrl.u32 %v548, 7
        %v550 = vsub.s32 0, %v549
        %v551 = vrot.slane %v546, %v550
        %v552 = vlaneseq
        %v553 = vshrl.u32 %v552, 7
        %v554 = vsub.s32 1, %v553
        %v555 = vrot.slane %v546, %v554
        %v556 = vcombine.low %v551, %v555
        %557 = vrot.lane.b32.xlu0 %v556, 127
        %v558 = vpop.permute.xlu0 %557
        %v559 = vrot.slane %v558, 4
        %vm560 = vcmask 1039360
        %v561 = vsel %vm560, %v558, %v559
        %v563 = vmul.f32 %v349, %v561
        %v565 = vcombine.high %v563, %v563
        %566 = vrot.lane.b32.xlu0 %v563, 1
        %v567 = vpop.permute.xlu0 %566
        %568 = vrot.lane.b32.xlu0 %v565, 1
        %v569 = vpop.permute.xlu0 %568
        %vm570 = vcmask 7168
        %v571 = vsel %vm570, %v567, %v569
        %vm574 = vcmask 1043464
        %575 = vst.msk [vmem:[#allocation2 + $0x30] sm:$0xf] %vm574, %v567
        %576 = vst [vmem:[#allocation2 + $0x38] sm:$0xf] %v571
        %vm577 = vcmask 3072
        %578 = vst.msk [vmem:[#allocation2 + $0x30] sm:$0xf] %vm577, 0.0
        %v579 = vld [vmem:[%s545] ss:$8 sm:$0x3]
        %v581 = vlaneseq
        %v582 = vshrl.u32 %v581, 7
        %v583 = vsub.s32 0, %v582
        %v584 = vrot.slane %v579, %v583
        %v585 = vlaneseq
        %v586 = vshrl.u32 %v585, 7
        %v587 = vsub.s32 1, %v586
        %v588 = vrot.slane %v579, %v587
        %v589 = vcombine.low %v584, %v588
        %590 = vrot.lane.b32.xlu0 %v589, 127
        %v591 = vpop.permute.xlu0 %590
        %v592 = vrot.slane %v591, 4
        %v593 = vsel %vm560, %v591, %v592
        %v595 = vmul.f32 %v350, %v593
        %v597 = vcombine.low %v595, %v595
        %598 = vrot.lane.b32.xlu0 %v597, 1
        %v599 = vpop.permute.xlu0 %598
        %600 = vrot.lane.b32.xlu0 %v595, 1
        %v601 = vpop.permute.xlu0 %600
        %v602 = vsel %vm570, %v599, %v601
        %vm605 = vcmask 1047564
        %606 = vst.msk [vmem:[#allocation2 + $0x30] sm:$0xf0] %vm605, %v599
        %607 = vst [vmem:[#allocation2 + $0x38] sm:$0xf0] %v602
        %vm608 = vcmask 7172
        %609 = vst.msk [vmem:[#allocation2 + $0x30] sm:$0xf0] %vm608, 0.0
        %s610 = scalar_lea.vmem [#allocation9], 4
        %v611 = vld [vmem:[%s610] ss:$8 sm:$0x3]
        %v613 = vlaneseq
        %v614 = vshrl.u32 %v613, 7
        %v615 = vsub.s32 0, %v614
        %v616 = vrot.slane %v611, %v615
        %v617 = vlaneseq
        %v618 = vshrl.u32 %v617, 7
        %v619 = vsub.s32 1, %v618
        %v620 = vrot.slane %v611, %v619
        %v621 = vcombine.low %v616, %v620
        %v623 = vmul.f32 %v349, %v621
        %v625 = vcombine.high %v623, %v623
        %627 = vst [vmem:[#allocation2 + $0x40] sm:$0xf] %v623
        %628 = vst [vmem:[#allocation2 + $0x48] sm:$0xf] %v625
        %v629 = vld [vmem:[%s610] ss:$8 sm:$0x3]
        %v631 = vlaneseq
        %v632 = vshrl.u32 %v631, 7
        %v633 = vsub.s32 0, %v632
        %v634 = vrot.slane %v629, %v633
        %v635 = vlaneseq
        %v636 = vshrl.u32 %v635, 7
        %v637 = vsub.s32 1, %v636
        %v638 = vrot.slane %v629, %v637
        %v639 = vcombine.low %v634, %v638
        %v641 = vmul.f32 %v350, %v639
        %v643 = vcombine.low %v641, %v641
        %645 = vst [vmem:[#allocation2 + $0x40] sm:$0xf0] %v643
        %646 = vst [vmem:[#allocation2 + $0x48] sm:$0xf0] %v641
        %s647 = scalar_lea.vmem [#allocation9], 5
        %v648 = vld [vmem:[%s647] ss:$8 sm:$0x3]
        %v650 = vlaneseq
        %v651 = vshrl.u32 %v650, 7
        %v652 = vsub.s32 0, %v651
        %v653 = vrot.slane %v648, %v652
        %v654 = vlaneseq
        %v655 = vshrl.u32 %v654, 7
        %v656 = vsub.s32 1, %v655
        %v657 = vrot.slane %v648, %v656
        %v658 = vcombine.low %v653, %v657
        %659 = vrot.lane.b32.xlu0 %v658, 1
        %v660 = vpop.permute.xlu0 %659
        %v661 = vrot.slane %v660, 4
        %v662 = vsel %vm570, %v661, %v660
        %v664 = vmul.f32 %v349, %v662
        %v666 = vcombine.high %v664, %v664
        %667 = vrot.lane.b32.xlu0 %v664, 127
        %v668 = vpop.permute.xlu0 %667
        %669 = vrot.lane.b32.xlu0 %v666, 127
        %v670 = vpop.permute.xlu0 %669
        %v671 = vsel %vm560, %v668, %v670
        %674 = vst [vmem:[#allocation2 + $0x50] sm:$0xf] %v671
        %vm675 = vcmask 1035264
        %676 = vst.msk [vmem:[#allocation2 + $0x58] sm:$0xf] %vm675, %v670
        %vm677 = vcmask 1044472
        %678 = vst.msk [vmem:[#allocation2 + $0x58] sm:$0xf] %vm677, 0.0
        %v679 = vld [vmem:[%s647] ss:$8 sm:$0x3]
        %v681 = vlaneseq
        %v682 = vshrl.u32 %v681, 7
        %v683 = vsub.s32 0, %v682
        %v684 = vrot.slane %v679, %v683
        %v685 = vlaneseq
        %v686 = vshrl.u32 %v685, 7
        %v687 = vsub.s32 1, %v686
        %v688 = vrot.slane %v679, %v687
        %v689 = vcombine.low %v684, %v688
        %690 = vrot.lane.b32.xlu0 %v689, 1
        %v691 = vpop.permute.xlu0 %690
        %v692 = vrot.slane %v691, 4
        %v693 = vsel %vm570, %v692, %v691
        %v695 = vmul.f32 %v350, %v693
        %v697 = vcombine.low %v695, %v695
        %698 = vrot.lane.b32.xlu0 %v697, 127
        %v699 = vpop.permute.xlu0 %698
        %700 = vrot.lane.b32.xlu0 %v695, 127
        %v701 = vpop.permute.xlu0 %700
        %v702 = vsel %vm560, %v699, %v701
        %705 = vst [vmem:[#allocation2 + $0x50] sm:$0xf0] %v702
        %vm706 = vcmask 1039364
        %707 = vst.msk [vmem:[#allocation2 + $0x58] sm:$0xf0] %vm706, %v701
        %vm708 = vcmask 1048572
        %709 = vst.msk [vmem:[#allocation2 + $0x58] sm:$0xf0] %vm708, 0.0
        %s710 = scalar_lea.vmem [#allocation9], 6
        %v711 = vld [vmem:[%s710] ss:$8 sm:$0x3]
        %v713 = vlaneseq
        %v714 = vshrl.u32 %v713, 7
        %v715 = vsub.s32 0, %v714
        %v716 = vrot.slane %v711, %v715
        %v717 = vlaneseq
        %v718 = vshrl.u32 %v717, 7
        %v719 = vsub.s32 1, %v718
        %v720 = vrot.slane %v711, %v719
        %v721 = vcombine.low %v716, %v720
        %722 = vrot.lane.b32.xlu0 %v721, 15
        %v723 = vpop.permute.xlu0 %722
        %v724 = vrot.slane %v723, 4
        %v725 = vsel %vm505, %v724, %v723
        %v727 = vmul.f32 %v349, %v725
        %v729 = vcombine.high %v727, %v727
        %730 = vrot.lane.b32.xlu0 %v727, 113
        %v731 = vpop.permute.xlu0 %730
        %732 = vrot.lane.b32.xlu0 %v729, 113
        %v733 = vpop.permute.xlu0 %732
        %v734 = vsel %vm495, %v731, %v733
        %737 = vst [vmem:[#allocation2 + $0x60] sm:$0xf] %v734
        %vm738 = vcmask 920576
        %739 = vst.msk [vmem:[#allocation2 + $0x68] sm:$0xf] %vm738, %v733
        %vm740 = vcmask 1044360
        %741 = vst.msk [vmem:[#allocation2 + $0x68] sm:$0xf] %vm740, 0.0
        %v742 = vld [vmem:[%s710] ss:$8 sm:$0x3]
        %v744 = vlaneseq
        %v745 = vshrl.u32 %v744, 7
        %v746 = vsub.s32 0, %v745
        %v747 = vrot.slane %v742, %v746
        %v748 = vlaneseq
        %v749 = vshrl.u32 %v748, 7
        %v750 = vsub.s32 1, %v749
        %v751 = vrot.slane %v742, %v750
        %v752 = vcombine.low %v747, %v751
        %753 = vrot.lane.b32.xlu0 %v752, 15
        %v754 = vpop.permute.xlu0 %753
        %v755 = vrot.slane %v754, 4
        %v756 = vsel %vm505, %v755, %v754
        %v758 = vmul.f32 %v350, %v756
        %v760 = vcombine.low %v758, %v758
        %761 = vrot.lane.b32.xlu0 %v760, 113
        %v762 = vpop.permute.xlu0 %761
        %763 = vrot.lane.b32.xlu0 %v758, 113
        %v764 = vpop.permute.xlu0 %763
        %v765 = vsel %vm495, %v762, %v764
        %768 = vst [vmem:[#allocation2 + $0x60] sm:$0xf0] %v765
        %vm769 = vcmask 924676
        %770 = vst.msk [vmem:[#allocation2 + $0x68] sm:$0xf0] %vm769, %v764
        %vm771 = vcmask 1048460
        %772 = vst.msk [vmem:[#allocation2 + $0x68] sm:$0xf0] %vm771, 0.0
        %s773 = scalar_lea.vmem [#allocation9], 7
        %v774 = vld [vmem:[%s773] ss:$8 sm:$0x3]
        %v776 = vlaneseq
        %v777 = vshrl.u32 %v776, 7
        %v778 = vsub.s32 0, %v777
        %v779 = vrot.slane %v774, %v778
        %v780 = vlaneseq
        %v781 = vshrl.u32 %v780, 7
        %v782 = vsub.s32 1, %v781
        %v783 = vrot.slane %v774, %v782
        %v784 = vcombine.low %v779, %v783
        %785 = vrot.lane.b32.xlu0 %v784, 16
        %v786 = vpop.permute.xlu0 %785
        %v787 = vrot.slane %v786, 4
        %v788 = vsel %vm440, %v787, %v786
        %v790 = vmul.f32 %v349, %v788
        %v792 = vcombine.high %v790, %v790
        %793 = vrot.lane.b32.xlu0 %v790, 112
        %v794 = vpop.permute.xlu0 %793
        %795 = vrot.lane.b32.xlu0 %v792, 112
        %v796 = vpop.permute.xlu0 %795
        %v797 = vsel %vm430, %v794, %v796
        %800 = vst [vmem:[#allocation2 + $0x70] sm:$0xf] %v797
        %vm801 = vcmask 912384
        %802 = vst.msk [vmem:[#allocation2 + $0x78] sm:$0xf] %vm801, %v796
        %vm803 = vcmask 1044352
        %804 = vst.msk [vmem:[#allocation2 + $0x78] sm:$0xf] %vm803, 0.0
        %v805 = vld [vmem:[%s773] ss:$8 sm:$0x3]
        %v807 = vlaneseq
        %v808 = vshrl.u32 %v807, 7
        %v809 = vsub.s32 0, %v808
        %v810 = vrot.slane %v805, %v809
        %v811 = vlaneseq
        %v812 = vshrl.u32 %v811, 7
        %v813 = vsub.s32 1, %v812
        %v814 = vrot.slane %v805, %v813
        %v815 = vcombine.low %v810, %v814
        %816 = vrot.lane.b32.xlu0 %v815, 16
        %v817 = vpop.permute.xlu0 %816
        %v818 = vrot.slane %v817, 4
        %v819 = vsel %vm440, %v818, %v817
        %v821 = vmul.f32 %v350, %v819
        %v823 = vcombine.low %v821, %v821
        %824 = vrot.lane.b32.xlu0 %v823, 112
        %v825 = vpop.permute.xlu0 %824
        %826 = vrot.lane.b32.xlu0 %v821, 112
        %v827 = vpop.permute.xlu0 %826
        %v828 = vsel %vm430, %v825, %v827
        %831 = vst [vmem:[#allocation2 + $0x70] sm:$0xf0] %v828
        %vm832 = vcmask 916484
        %833 = vst.msk [vmem:[#allocation2 + $0x78] sm:$0xf0] %vm832, %v827
        %vm834 = vcmask 1048452
        %835 = vst.msk [vmem:[#allocation2 + $0x78] sm:$0xf0] %vm834, 0.0
        %s836 = scalar_lea.vmem [#allocation9], 16
        %v837 = vld [vmem:[%s836] ss:$8 sm:$0x3]
        %v839 = vlaneseq
        %v840 = vshrl.u32 %v839, 7
        %v841 = vsub.s32 0, %v840
        %v842 = vrot.slane %v837, %v841
        %v843 = vlaneseq
        %v844 = vshrl.u32 %v843, 7
        %v845 = vsub.s32 1, %v844
        %v846 = vrot.slane %v837, %v845
        %v847 = vcombine.low %v842, %v846
        %848 = vrot.lane.b32.xlu0 %v847, 17
        %v849 = vpop.permute.xlu0 %848
        %v850 = vrot.slane %v849, 4
        %v851 = vsel %vm375, %v850, %v849
        %v853 = vmul.f32 %v349, %v851
        %v855 = vcombine.high %v853, %v853
        %856 = vrot.lane.b32.xlu0 %v853, 111
        %v857 = vpop.permute.xlu0 %856
        %858 = vrot.lane.b32.xlu0 %v855, 111
        %v859 = vpop.permute.xlu0 %858
        %v860 = vsel %vm365, %v857, %v859
        %863 = vst [vmem:[#allocation2 + $0x80] sm:$0xf] %v860
        %vm864 = vcmask 904192
        %865 = vst.msk [vmem:[#allocation2 + $0x88] sm:$0xf] %vm864, %v859
        %vm866 = vcmask 1044344
        %867 = vst.msk [vmem:[#allocation2 + $0x88] sm:$0xf] %vm866, 0.0
        %v868 = vld [vmem:[%s836] ss:$8 sm:$0x3]
        %v870 = vlaneseq
        %v871 = vshrl.u32 %v870, 7
        %v872 = vsub.s32 0, %v871
        %v873 = vrot.slane %v868, %v872
        %v874 = vlaneseq
        %v875 = vshrl.u32 %v874, 7
        %v876 = vsub.s32 1, %v875
        %v877 = vrot.slane %v868, %v876
        %v878 = vcombine.low %v873, %v877
        %879 = vrot.lane.b32.xlu0 %v878, 17
        %v880 = vpop.permute.xlu0 %879
        %v881 = vrot.slane %v880, 4
        %v882 = vsel %vm375, %v881, %v880
        %v884 = vmul.f32 %v350, %v882
        %v886 = vcombine.low %v884, %v884
        %887 = vrot.lane.b32.xlu0 %v886, 111
        %v888 = vpop.permute.xlu0 %887
        %889 = vrot.lane.b32.xlu0 %v884, 111
        %v890 = vpop.permute.xlu0 %889
        %v891 = vsel %vm365, %v888, %v890
        %894 = vst [vmem:[#allocation2 + $0x80] sm:$0xf0] %v891
        %vm895 = vcmask 908292
        %896 = vst.msk [vmem:[#allocation2 + $0x88] sm:$0xf0] %vm895, %v890
        %vm897 = vcmask 1048444
        %898 = vst.msk [vmem:[#allocation2 + $0x88] sm:$0xf0] %vm897, 0.0
        %v899 = vld [vmem:[%s2] sm:$0x3]
        %v900 = vld [vmem:[#allocation2] sm:$0xff]
        %v901 = vld [vmem:[#allocation2 + $0x8] sm:$0xff]
        %v902 = vld [vmem:[#allocation2 + $0x10] sm:$0xff]
        %v903 = vld [vmem:[#allocation2 + $0x18] sm:$0xff]
        %v904 = vld [vmem:[#allocation2 + $0x20] sm:$0xff]
        %v905 = vld [vmem:[#allocation2 + $0x28] sm:$0xff]
        %v906 = vld [vmem:[#allocation2 + $0x30] sm:$0xff]
        %v907 = vld [vmem:[#allocation2 + $0x38] sm:$0xff]
        %v908 = vld [vmem:[#allocation2 + $0x40] sm:$0xff]
        %v909 = vld [vmem:[#allocation2 + $0x48] sm:$0xff]
        %v910 = vld [vmem:[#allocation2 + $0x50] sm:$0xff]
        %v911 = vld [vmem:[#allocation2 + $0x58] sm:$0xff]
        %v912 = vld [vmem:[#allocation2 + $0x60] sm:$0xff]
        %v913 = vld [vmem:[#allocation2 + $0x68] sm:$0xff]
        %v914 = vld [vmem:[#allocation2 + $0x70] sm:$0xff]
        %v915 = vld [vmem:[#allocation2 + $0x78] sm:$0xff]
        %v916 = vld [vmem:[#allocation2 + $0x80] sm:$0xff]
        %v917 = vld [vmem:[#allocation2 + $0x88] sm:$0xff]
        %v918 = vpack.c.bf16 %v902, %v900
        %v919 = vpack.c.bf16 %v903, %v901
        %v920 = vpack.c.bf16 %v906, %v904
        %v921 = vpack.c.bf16 %v907, %v905
        %v922 = vpack.c.bf16 %v910, %v908
        %v923 = vpack.c.bf16 %v911, %v909
        %v924 = vpack.c.bf16 %v914, %v912
        %v925 = vpack.c.bf16 %v915, %v913
        %v926 = vpack.c.bf16 %v916, %v916
        %v927 = vpack.c.bf16 %v917, %v917
        %v928 = vld [vmem:[%s3] sm:$0xf]
        %930 = vset.pattern.permute.xlu0 0
        %931 = vperm.xlu0 %930, %v928
        %v932 = vpop.permute.xlu0 %931
        %vm934 = vcmask 588800
        %v936 = vsel %vm934, %v899, 0
        %vm938 = vcmask 1043456
        %v940 = vsel %vm938, %v926, 0
        %v943 = vsel %vm938, %v927, 0
        %945 = vmatprep.subr.bf16.mxu0 0
        %946 = vmatpush1.bf16.msra.mxu0 0
        %947 = vmatprep.subr.bf16.mxu0 0
        %948 = vmatpush1.bf16.msra.mxu0 0
        %949 = vmatprep.subr.bf16.mxu0 0
        %950 = vmatpush1.bf16.msra.mxu0 0
        %951 = vmatprep.subr.bf16.mxu0 %v943
        %952 = vmatpush1.bf16.msra.mxu0 %v940
        %953 = vmatprep.subr.bf16.mxu0 %v925
        %954 = vmatpush1.bf16.msra.mxu0 %v924
        %955 = vmatprep.subr.bf16.mxu0 %v923
        %956 = vmatpush1.bf16.msra.mxu0 %v922
        %957 = vmatprep.subr.bf16.mxu0 %v921
        %958 = vmatpush1.bf16.msra.mxu0 %v920
        %959 = vmatprep.subr.bf16.mxu0 %v919
        %960 = vmatpush1.bf16.msra.mxu0 %v918
        %961 = vmatprep.subr.bf16.mxu0 0
        %962 = vmatpush2.bf16.msra.mxu0 0
        %963 = vmatprep.subr.bf16.mxu0 0
        %964 = vmatpush2.bf16.msra.mxu0 0
        %965 = vmatprep.subr.bf16.mxu0 0
        %966 = vmatpush2.bf16.msra.mxu0 0
        %967 = vmatprep.subr.bf16.mxu0 0
        %968 = vmatpush2.bf16.msra.mxu0 0
        %969 = vmatprep.subr.bf16.mxu0 0
        %970 = vmatpush2.bf16.msra.mxu0 0
        %971 = vmatprep.subr.bf16.mxu0 0
        %972 = vmatpush2.bf16.msra.mxu0 0
        %973 = vmatprep.subr.bf16.mxu0 0
        %974 = vmatpush2.bf16.msra.mxu0 0
        %975 = vmatprep.subr.bf16.mxu0 0
        %976 = vmatpush2.bf16.msra.mxu0 0
        %977 = vmatprep.mubr.bf16.mxu0 0
        %978 = vmatmul.mubr.bf16.gmra.mxu0 %v936
        %v979 = vpop.f32.mrf.mxu0
        %v980 = vadd.f32 %v932, %v979
        %v981 = vpop.f32.mrf.mxu0
        %v982 = vadd.f32 %v932, %v981
        %v983 = vpop.f32.mrf.mxu0
        %v984 = vpop.f32.mrf.mxu0
        %985 = vdwg.mxu0
        %v986 = vmax.f32 %v980, 0.0
        %v987 = vmax.f32 %v982, 0.0
        %v988 = vld [vmem:[%s4] sm:$0xf]
        %990 = vset.pattern.permute.xlu0 0
        %991 = vperm.xlu0 %990, %v988
        %v992 = vpop.permute.xlu0 %991
        %v994 = vmul.f32 %v986, %v992
        %v995 = vmul.f32 %v987, %v992
        %v996 = vsel %vm938, %v994, 0.0
        %v997 = vrot.slane %v996, 4
        %v998 = vadd.f32 %v996, %v997
        %v999 = vrot.slane %v998, 2
        %v1000 = vadd.f32 %v998, %v999
        %v1001 = vrot.slane %v1000, 1
        %v1002 = vadd.f32 %v1000, %v1001
        %v1003 = vsel %vm938, %v995, 0.0
        %v1004 = vrot.slane %v1003, 4
        %v1005 = vadd.f32 %v1003, %v1004
        %v1006 = vrot.slane %v1005, 2
        %v1007 = vadd.f32 %v1005, %v1006
        %v1008 = vrot.slane %v1007, 1
        %v1009 = vadd.f32 %v1007, %v1008
        %s1010 = sld [smem:[#allocation3]]
        %v1011 = vstv %s1010
        %v1012 = vadd.f32 %v1002, %v1011
        %v1013 = vadd.f32 %v1009, %v1011
        %v1014 = vxor.u32 %v1012, 2147483648
        %v1015 = vxor.u32 %v1013, 2147483648
        %v1016 = vmul.f32 %v1014, 1.442695
        %v1017 = vpow.pop %v1016
        %v1018 = vmul.f32 %v1015, 1.442695
        %v1019 = vpow.pop %v1018
        %v1020 = vadd.f32 %v1017, 1.0
        %v1021 = vadd.f32 %v1019, 1.0
        %v1022 = vrcp.pop %v1020
        %v1023 = vmul.f32 1.0, %v1022
        %v1024 = vrcp.pop %v1021
        %v1025 = vmul.f32 1.0, %v1024
        %v1028 = vcombine.low %v1023, %v1025
        %v1030 = vmul.f32 %v350, %v1028
        %v1031 = vadd.f32 %v349, %v1030
        %1032 = vst [vmem:[%s347] sm:$0xff] %v1031
        %s1033 = sand.u32 %s193, 1
        %s1034 = scalar_lea.sflag [#allocation6], %s1033
        %s1035 = sand.u32 %s193, 1
        %s1036 = smul.addr %s1035, 8
        %s1037 = scalar_lea.vmem [#allocation10], %s1036
        // Predicated region
        $region61: #{tpu_custom_call.1} parent=47 // pred_check
          %p1038 = pneg %p203
        $region62: #{tpu_custom_call.1} parent=47 // pred_check_branch
          %1040 = sbr.rel (%p1038) target = $region64
        $region63: #{tpu_custom_call.1} parent=47 // pred_region
          %s1042 = ssub.s32 128, 128
          %1043 = vsyncadd %s1034, %s1042
          %s1044 = smul.addr %s28, 2
          %s1045 = smul.addr %s1044, 64
          %s1046 = scalar_lea.hbm %s7, %s1045
          %s1048 = sshll.u32 %s1037, 4
          %s1049 = int_to_ptr.vmem [resolvable:$true] %s1048
          %1051 = dma.vmem_to_hbm [thread:$0]  %s1049, 128, %s1046, %s1034
        $region64: #{tpu_custom_call.1} parent=47 // pred_fallthru
          _
      $region48: #{tpu_custom_call.1} parent=5 // pred_fallthru
        _
      %p1052 = scmp.le.s32.totalorder 2, %s23
      // Predicated region
      $region65: #{tpu_custom_call.1} parent=5 // pred_check
        %p1053 = pneg %p1052
      $region66: #{tpu_custom_call.1} parent=5 // pred_check_branch
        %1055 = sbr.rel (%p1053) target = $region68
      $region67: #{tpu_custom_call.1} parent=5 // pred_region
        %s1056 = ssub.s32 %s23, 2
        // Predicated region
        $region69: #{tpu_custom_call.1} parent=67 // pred_check
          %p1057 = pneg %p209
        $region70: #{tpu_custom_call.1} parent=67 // pred_check_branch
          %1059 = sbr.rel (%p1057) target = $region72
        $region71: #{tpu_custom_call.1} parent=67 // pred_region
          %s1060 = sand.u32 %s194, 1
          %s1061 = scalar_lea.sflag [#allocation6], %s1060
          %s1062 = sand.u32 %s194, 1
          %s1063 = smul.addr %s1062, 8
          %s1064 = scalar_lea.vmem [#allocation10], %s1063
          %1065 = dma.done %s1061, 128
        $region72: #{tpu_custom_call.1} parent=67 // pred_fallthru
          _
      $region68: #{tpu_custom_call.1} parent=5 // pred_fallthru
        _
    $region6: #{tpu_custom_call.1} parent=1 // loop_footer
      %s27 = sadd.s32 1, %s23
    $region7: #{tpu_custom_call.1} parent=1 // loop_footer_branch
      %22 = sbr.rel target = $region3
    $region8: #{tpu_custom_call.1} parent=1 // loop_exit
      _
    %1066 = vsyncpa [#allocation5], 1
    %s1067 = scalar_lea.sflag [#allocation5], 1
    %1068 = vsyncpa %s1067, 1
    %1069 = vsyncpa [#allocation8], 1
    %s1070 = scalar_lea.sflag [#allocation8], 1
    %1071 = vsyncpa %s1070, 1
    %1072 = vsyncpa [#allocation6], 1
    %s1073 = scalar_lea.sflag [#allocation6], 1
    %1074 = vsyncpa %s1073, 1

</llo_original>
